<compile_context>
chip_gen: v7x
topology: tpu7x:2x2x1
jax: 0.10.0
libtpu: 0.0.40
codegen_flags: <defaults>
</compile_context>

<pallas_src>
import jax
import jax.numpy as jnp
from jax.experimental import pallas as pl
from jax.experimental.pallas import tpu as pltpu

_BOTTLENECK_EXPANSION = 4


# ----------------------------------------------------------------------------------
# Fused bottleneck kernel (one H-tile of one image per grid step):
#   h = ReLU(x @ W_red + b_red)                       (1x1 reduce, BN folded)
#   h = ReLU(sum_{kh,kw} tap(h) @ W3[kh,kw] + b3)     (3x3 dilated conv, 9 matmuls)
#   h = h @ W_inc + b_inc                             (1x1 increase, BN folded)
#   out = ReLU(h + shortcut(x))                       (projection conv or identity)
# ----------------------------------------------------------------------------------
def _make_bottleneck_kernel(dilation, has_proj):
    d = int(dilation)

    def bottleneck_kernel(*refs):
        if has_proj:
            (x_ref, xh_ref, w_red_ref, b_red_ref, w3_ref, b3_ref,
             w_inc_ref, b_inc_ref, w_sc_ref, b_sc_ref, o_ref, pad_ref) = refs
        else:
            (x_ref, xh_ref, w_red_ref, b_red_ref, w3_ref, b3_ref,
             w_inc_ref, b_inc_ref, o_ref, pad_ref) = refs

        TH, Wo, Cout = o_ref.shape[1], o_ref.shape[2], o_ref.shape[3]
        Cin = x_ref.shape[3]
        Cmid = w_red_ref.shape[1]
        Hp, Wp = TH + 2 * d, Wo + 2 * d

        t = pl.program_id(1)
        n_tiles = pl.num_programs(1)

        w_red = w_red_ref[...]          # bf16 (Cin, Cmid), resident (constant index_map)
        b_red = b_red_ref[...]          # f32  (1, Cmid)

        def reduce1x1(rows_cin):        # (R, Cin) -> f32 (R, Cmid): 1x1 conv + BN + ReLU
            h = jnp.dot(rows_cin.astype(jnp.bfloat16), w_red,
                        preferred_element_type=jnp.float32)
            return jnp.maximum(h + b_red, 0.0)

        # ---- 1x1 reduce on the TH main rows ----
        x_main = x_ref[0].reshape(TH * Wo, Cin)
        h1_main = reduce1x1(x_main)                                  # (TH*Wo, Cmid) f32

        # ---- assemble the zero-padded h1 tile in VMEM (bf16) ----
        # W borders are tiny; rewritten every step (scratch is not zero-initialized and
        # "first step on this core" is not knowable under megacore, so zero-once is unsafe).
        pad_ref[:, 0:d, :] = jnp.zeros((Hp, d, Cmid), pad_ref.dtype)
        pad_ref[:, Wo + d:Wp, :] = jnp.zeros((Hp, d, Cmid), pad_ref.dtype)
        pad_ref[d:TH + d, d:Wo + d, :] = (
            h1_main.reshape(TH, Wo, Cmid).astype(pad_ref.dtype))

        # Halo rows (d above / d below the tile) are recomputed from neighbouring image
        # rows passed as a small side input; at the image boundary they are the conv's
        # zero padding.
        xh = xh_ref[0]                                               # (2d, Wo, Cin)

        @pl.when(t > 0)
        def _():
            h1_top = reduce1x1(xh[0:d].reshape(d * Wo, Cin))
            pad_ref[0:d, d:Wo + d, :] = (
                h1_top.reshape(d, Wo, Cmid).astype(pad_ref.dtype))

        @pl.when(t == 0)
        def _():
            pad_ref[0:d, d:Wo + d, :] = jnp.zeros((d, Wo, Cmid), pad_ref.dtype)

        @pl.when(t < n_tiles - 1)
        def _():
            h1_bot = reduce1x1(xh[d:2 * d].reshape(d * Wo, Cin))
            pad_ref[TH + d:Hp, d:Wo + d, :] = (
                h1_bot.reshape(d, Wo, Cmid).astype(pad_ref.dtype))

        @pl.when(t == n_tiles - 1)
        def _():
            pad_ref[TH + d:Hp, d:Wo + d, :] = jnp.zeros((d, Wo, Cmid), pad_ref.dtype)

        # ---- 3x3 dilated conv: 9 accumulated K=Cmid matmuls (no im2col concat slab) ----
        acc = jnp.zeros((TH * Wo, Cmid), jnp.float32)
        for kh in range(3):
            for kw in range(3):
                tap = pad_ref[kh * d:kh * d + TH, kw * d:kw * d + Wo, :]
                wk = w3_ref[(kh * 3 + kw) * Cmid:(kh * 3 + kw + 1) * Cmid, :]
                acc = acc + jnp.dot(tap.reshape(TH * Wo, Cmid), wk,
                                    preferred_element_type=jnp.float32)
        h2 = jnp.maximum(acc + b3_ref[...], 0.0).astype(jnp.bfloat16)

        # ---- 1x1 increase + folded BN (no ReLU) ----
        h3 = jnp.dot(h2, w_inc_ref[...], preferred_element_type=jnp.float32)
        h3 = h3 + b_inc_ref[...]

        # ---- shortcut (projection conv on the downsampling block, identity otherwise) ----
        if has_proj:
            sc = jnp.dot(x_main.astype(jnp.bfloat16), w_sc_ref[...],
                         preferred_element_type=jnp.float32) + b_sc_ref[...]
        else:
            sc = x_main.astype(jnp.float32)          # identity: Cin == Cout (asserted)

        o_ref[0] = jnp.maximum(h3 + sc, 0.0).reshape(TH, Wo, Cout).astype(o_ref.dtype)

    return bottleneck_kernel


def _pick_tile_rows(n_rows, dilation, target_rows=32):
    """Largest divisor of n_rows that is <= target_rows and >= dilation (halo-safe)."""
    cands = [th for th in range(1, n_rows + 1)
             if n_rows % th == 0 and th <= target_rows
             and (th >= dilation or th == n_rows)]
    return max(cands) if cands else n_rows


def _vmem_bytes_estimate(TH, Wo, Cin, Cmid, Cout, d, has_proj):
    f32, bf16 = 4, 2
    x_blk = TH * Wo * Cin * f32
    halo_blk = 2 * d * Wo * Cin * f32
    out_blk = TH * Wo * Cout * f32
    pad = (TH + 2 * d) * (Wo + 2 * d) * Cmid * bf16
    w = (Cin * Cmid + 9 * Cmid * Cmid + Cmid * Cout
         + (Cin * Cout if has_proj else 0)) * bf16
    b = (2 * Cmid + Cout + (Cout if has_proj else 0)) * f32
    live = TH * Wo * (Cmid + Cout) * f32 * 2        # f32 accumulators / intermediates
    # inputs/outputs and (by default) weights are double-buffered by the pipeline.
    return 2 * (x_blk + halo_blk + out_blk + w + b) + pad + live


def _bottleneck_forward(x_nhwc, p, *, stride, dilation, has_proj, tile_rows=None):
    """One _Bottleneck block on an NHWC feature map (eval-mode BN folded into p)."""
    if stride > 1:
        # 1x1 convs with stride s only read pixels (i*s, j*s): subsample once up front
        # so every in-kernel op is stride 1 (no strided ref reads).
        x_nhwc = x_nhwc[:, ::stride, ::stride, :]
    N, Ho, Wo, Cin = x_nhwc.shape
    d = int(dilation)
    Cmid = p["w_red"].shape[1]
    Cout = p["w_inc"].shape[1]
    if not has_proj:
        assert Cin == Cout, "identity shortcut requires Cin == Cout"

    TH = tile_rows if tile_rows is not None else _pick_tile_rows(Ho, d)
    if Ho % TH != 0 or (TH < d and TH != Ho):
        TH = _pick_tile_rows(Ho, d)
    n_tiles = Ho // TH

    # Per-tile halo rows (d above + d below), built once in the wrapper (tiny: 2*d rows
    # per tile). Out-of-image rows are zero here and masked in-kernel anyway.
    x_padh = jnp.pad(x_nhwc, ((0, 0), (d, d), (0, 0), (0, 0)))
    halos = []
    for ti in range(n_tiles):
        top = x_padh[:, ti * TH: ti * TH + d]
        bot = x_padh[:, ti * TH + TH + d: ti * TH + TH + 2 * d]
        halos.append(jnp.concatenate([top, bot], axis=1))
    x_halo = jnp.concatenate(halos, axis=1)          # (N, n_tiles*2*d, Wo, Cin)

    ins = [x_nhwc, x_halo, p["w_red"], p["b_red"], p["w3"], p["b3"],
           p["w_inc"], p["b_inc"]]
    in_specs = [
        pl.BlockSpec((1, TH, Wo, Cin), lambda n, t: (n, t, 0, 0)),
        pl.BlockSpec((1, 2 * d, Wo, Cin), lambda n, t: (n, t, 0, 0)),
        pl.BlockSpec((Cin, Cmid), lambda n, t: (0, 0)),
        pl.BlockSpec((1, Cmid), lambda n, t: (0, 0)),
        pl.BlockSpec((9 * Cmid, Cmid), lambda n, t: (0, 0)),
        pl.BlockSpec((1, Cmid), lambda n, t: (0, 0)),
        pl.BlockSpec((Cmid, Cout), lambda n, t: (0, 0)),
        pl.BlockSpec((1, Cout), lambda n, t: (0, 0)),
    ]
    if has_proj:
        ins += [p["w_sc"], p["b_sc"]]
        in_specs += [
            pl.BlockSpec((Cin, Cout), lambda n, t: (0, 0)),
            pl.BlockSpec((1, Cout), lambda n, t: (0, 0)),
        ]

    est = _vmem_bytes_estimate(TH, Wo, Cin, Cmid, Cout, d, has_proj)
    vmem_limit = int(min(64 << 20, max(16 << 20, 2 * est)))

    return pl.pallas_call(
        _make_bottleneck_kernel(d, has_proj),
        out_shape=jax.ShapeDtypeStruct((N, Ho, Wo, Cout), jnp.float32),
        grid_spec=pltpu.PrefetchScalarGridSpec(
            num_scalar_prefetch=0,
            grid=(N, n_tiles),
            in_specs=in_specs,
            out_specs=pl.BlockSpec((1, TH, Wo, Cout), lambda n, t: (n, t, 0, 0)),
            scratch_shapes=[pltpu.VMEM((TH + 2 * d, Wo + 2 * d, Cmid), jnp.bfloat16)],
        ),
        compiler_params=pltpu.CompilerParams(
            dimension_semantics=("parallel", "parallel"),
            vmem_limit_bytes=vmem_limit),
    )(*ins)


# ----------------------------------------------------------------------------------
# Parameter folding (eval-mode BatchNorm folded into conv weight/bias, bf16 weights).
# ----------------------------------------------------------------------------------
def _fold_bn(w_oihw, bn, eps=1e-5):
    gamma, beta, mean, var = bn
    scale = gamma / jnp.sqrt(var + eps)
    w = w_oihw.astype(jnp.float32) * scale[:, None, None, None]
    b = (beta - mean * scale).astype(jnp.float32)
    return w, b


def fold_block_params(raw, eps=1e-5):
    """Fold BN into each conv and pack weights as bf16 2-D matmul operands."""
    out = {}
    w, b = _fold_bn(raw["reduce"]["w"], raw["reduce"]["bn"], eps)
    out["w_red"] = jnp.transpose(w[:, :, 0, 0], (1, 0)).astype(jnp.bfloat16)   # (Cin, Cmid)
    out["b_red"] = b.reshape(1, -1)

    w, b = _fold_bn(raw["conv3x3"]["w"], raw["conv3x3"]["bn"], eps)
    cmid = w.shape[0]
    # OIHW -> (kh, kw, cin, cout) -> (9*Cmid, Cmid); row block k = kh*3+kw matches the
    # in-kernel tap accumulation order.
    out["w3"] = jnp.transpose(w, (2, 3, 1, 0)).reshape(9 * cmid, cmid).astype(jnp.bfloat16)
    out["b3"] = b.reshape(1, -1)

    w, b = _fold_bn(raw["increase"]["w"], raw["increase"]["bn"], eps)
    out["w_inc"] = jnp.transpose(w[:, :, 0, 0], (1, 0)).astype(jnp.bfloat16)   # (Cmid, Cout)
    out["b_inc"] = b.reshape(1, -1)

    if raw.get("shortcut") is not None:
        w, b = _fold_bn(raw["shortcut"]["w"], raw["shortcut"]["bn"], eps)
        out["w_sc"] = jnp.transpose(w[:, :, 0, 0], (1, 0)).astype(jnp.bfloat16)  # (Cin, Cout)
        out["b_sc"] = b.reshape(1, -1)
    return out


def res_stage_forward(x_nchw, folded_blocks, *, stride, dilation, multi_grids,
                      tile_rows=None):
    """_ResStage forward: sequence of _Bottleneck blocks (first one downsamples)."""
    x = jnp.transpose(x_nchw, (0, 2, 3, 1)).astype(jnp.float32)   # NCHW -> NHWC (once)
    for i, p in enumerate(folded_blocks):
        x = _bottleneck_forward(
            x, p,
            stride=stride if i == 0 else 1,
            dilation=dilation * multi_grids[i],
            has_proj=(i == 0),
            tile_rows=tile_rows)
        # TODO(synk): for real stage sizes, inter-block activations could be bf16 to
        #             halve HBM traffic (biggest win on v5e); kept f32 for numerics.
    return jnp.transpose(x, (0, 3, 1, 2))                         # NHWC -> NCHW (once)


# ----------------------------------------------------------------------------------
# Pure-JAX reference (mirrors the PyTorch module, eval-mode BN, f32 everywhere).
# ----------------------------------------------------------------------------------
def _conv_bn_ref(x, w, bn, stride, padding, dilation, relu, eps=1e-5):
    y = jax.lax.conv_general_dilated(
        x, w, window_strides=(stride, stride),
        padding=((padding, padding), (padding, padding)),
        rhs_dilation=(dilation, dilation),
        dimension_numbers=("NCHW", "OIHW", "NCHW"))
    gamma, beta, mean, var = bn
    s = (gamma / jnp.sqrt(var + eps))[None, :, None, None]
    b = (beta - mean * gamma / jnp.sqrt(var + eps))[None, :, None, None]
    y = y * s + b
    return jnp.maximum(y, 0.0) if relu else y


def _res_stage_ref(x, raw_blocks, stride, dilation, multi_grids):
    for i, blk in enumerate(raw_blocks):
        s = stride if i == 0 else 1
        d = dilation * multi_grids[i]
        h = _conv_bn_ref(x, blk["reduce"]["w"], blk["reduce"]["bn"], s, 0, 1, True)
        h = _conv_bn_ref(h, blk["conv3x3"]["w"], blk["conv3x3"]["bn"], 1, d, d, True)
        h = _conv_bn_ref(h, blk["increase"]["w"], blk["increase"]["bn"], 1, 0, 1, False)
        if blk.get("shortcut") is not None:
            sc = _conv_bn_ref(x, blk["shortcut"]["w"], blk["shortcut"]["bn"], s, 0, 1, False)
        else:
            sc = x
        x = jnp.maximum(h + sc, 0.0)
    return x


if __name__ == "__main__":
    key = jax.random.PRNGKey(0)

    n_blocks = 2
    in_ch, out_ch = 16, 32                    # mid_ch = out_ch // 4 = 8
    stride, dilation = 2, 1
    multi_grids = [1, 2]
    N, H, W = 2, 16, 16

    def rand_conv(k, cout, cin, ksz):
        return 0.1 * jax.random.normal(k, (cout, cin, ksz, ksz), jnp.float32)

    def rand_bn(k, c):
        k1, k2, k3, k4 = jax.random.split(k, 4)
        return (1.0 + 0.1 * jax.random.normal(k1, (c,), jnp.float32),
                0.1 * jax.random.normal(k2, (c,), jnp.float32),
                0.1 * jax.random.normal(k3, (c,), jnp.float32),
                jax.random.uniform(k4, (c,), jnp.float32, 0.5, 1.5))

    key, kx = jax.random.split(key)
    x = jax.random.normal(kx, (N, in_ch, H, W), jnp.float32)

    mid_ch = out_ch // _BOTTLENECK_EXPANSION
    raw_blocks = []
    for i in range(n_blocks):
        cin_i = in_ch if i == 0 else out_ch
        key, k1, k2, k3, k4, k5, k6, k7, k8 = jax.random.split(key, 9)
        raw_blocks.append({
            "reduce":   {"w": rand_conv(k1, mid_ch, cin_i, 1), "bn": rand_bn(k2, mid_ch)},
            "conv3x3":  {"w": rand_conv(k3, mid_ch, mid_ch, 3), "bn": rand_bn(k4, mid_ch)},
            "increase": {"w": rand_conv(k5, out_ch, mid_ch, 1), "bn": rand_bn(k6, out_ch)},
            "shortcut": ({"w": rand_conv(k7, out_ch, cin_i, 1), "bn": rand_bn(k8, out_ch)}
                         if i == 0 else None),
        })

    folded = [fold_block_params(b) for b in raw_blocks]

    # tile_rows=4 -> grid (N=2, H-tiles=2) per block, exercising the halo path.
    out = res_stage_forward(x, folded, stride=stride, dilation=dilation,
                            multi_grids=multi_grids, tile_rows=4)
    out = jax.block_until_ready(out)

    ref = _res_stage_ref(x, raw_blocks, stride, dilation, multi_grids)
    assert out.shape == (N, out_ch, H // stride, W // stride), out.shape
    max_err = float(jnp.max(jnp.abs(out - ref)))
    # bf16 MXU operands vs a pure-f32 reference: 2e-2 abs/rel tolerance.
    assert bool(jnp.allclose(out, ref, atol=2e-2, rtol=2e-2)), max_err
    print("KERNEL_OK")
</pallas_src>

<mosaic_0001>
module attributes {stable_mosaic.version = 11 : i64} {
  func.func @bottleneck_kernel(%arg0: i32, %arg1: i32, %arg2: memref<1x4x8x16xf32, #tpu.memory_space<vmem>>, %arg3: memref<1x2x8x16xf32, #tpu.memory_space<vmem>>, %arg4: memref<16x8xbf16, #tpu.memory_space<vmem>>, %arg5: memref<1x8xf32, #tpu.memory_space<vmem>>, %arg6: memref<72x8xbf16, #tpu.memory_space<vmem>>, %arg7: memref<1x8xf32, #tpu.memory_space<vmem>>, %arg8: memref<8x32xbf16, #tpu.memory_space<vmem>>, %arg9: memref<1x32xf32, #tpu.memory_space<vmem>>, %arg10: memref<16x32xbf16, #tpu.memory_space<vmem>>, %arg11: memref<1x32xf32, #tpu.memory_space<vmem>>, %arg12: memref<1x4x8x32xf32, #tpu.memory_space<vmem>>, %arg13: memref<6x10x8xbf16, #tpu.memory_space<vmem>>) attributes {dimension_semantics = [#tpu.dimension_semantics<parallel>, #tpu.dimension_semantics<parallel>], iteration_bounds = array<i64: 2, 2>, scalar_prefetch = 0 : i64, scratch_operands = 1 : i64, tpu.core_type = #tpu.core_type<tc>, window_params = [{transform_indices = @transform_0, window_bounds = array<i64: 1, 4, 8, 16>}, {transform_indices = @transform_1, window_bounds = array<i64: 1, 2, 8, 16>}, {pipeline_mode = #tpu.pipeline_mode<synchronous>, transform_indices = @transform_2, window_bounds = array<i64: 16, 8>}, {pipeline_mode = #tpu.pipeline_mode<synchronous>, transform_indices = @transform_3, window_bounds = array<i64: 1, 8>}, {pipeline_mode = #tpu.pipeline_mode<synchronous>, transform_indices = @transform_4, window_bounds = array<i64: 72, 8>}, {pipeline_mode = #tpu.pipeline_mode<synchronous>, transform_indices = @transform_5, window_bounds = array<i64: 1, 8>}, {pipeline_mode = #tpu.pipeline_mode<synchronous>, transform_indices = @transform_6, window_bounds = array<i64: 8, 32>}, {pipeline_mode = #tpu.pipeline_mode<synchronous>, transform_indices = @transform_7, window_bounds = array<i64: 1, 32>}, {pipeline_mode = #tpu.pipeline_mode<synchronous>, transform_indices = @transform_8, window_bounds = array<i64: 16, 32>}, {pipeline_mode = #tpu.pipeline_mode<synchronous>, transform_indices = @transform_9, window_bounds = array<i64: 1, 32>}, {transform_indices = @transform_10, window_bounds = array<i64: 1, 4, 8, 32>}]} {
    %c0 = arith.constant 0 : index
    %c0_0 = arith.constant 0 : index
    %0 = vector.load %arg4[%c0, %c0_0] : memref<16x8xbf16, #tpu.memory_space<vmem>>, vector<16x8xbf16>
    %c0_1 = arith.constant 0 : index
    %c0_2 = arith.constant 0 : index
    %1 = vector.load %arg5[%c0_1, %c0_2] : memref<1x8xf32, #tpu.memory_space<vmem>>, vector<1x8xf32>
    %c0_3 = arith.constant 0 : index
    %c0_4 = arith.constant 0 : index
    %c0_5 = arith.constant 0 : index
    %c0_6 = arith.constant 0 : index
    %2 = vector.load %arg2[%c0_3, %c0_4, %c0_5, %c0_6] : memref<1x4x8x16xf32, #tpu.memory_space<vmem>>, vector<1x4x8x16xf32>
    %3 = vector.shape_cast %2 : vector<1x4x8x16xf32> to vector<4x8x16xf32>
    %4 = vector.shape_cast %3 : vector<4x8x16xf32> to vector<32x16xf32>
    %5 = arith.truncf %4 : vector<32x16xf32> to vector<32x16xbf16>
    %cst = arith.constant dense<0.000000e+00> : vector<32x8xf32>
    %6 = tpu.matmul %5, %0, %cst {dimension_numbers = #tpu.dot_dimension_numbers<[1], [0], [0], [1], [0, 0, 1, 1], [], []>} : vector<32x16xbf16>, vector<16x8xbf16>, vector<32x8xf32> -> vector<32x8xf32>
    %7 = vector.broadcast %1 : vector<1x8xf32> to vector<32x8xf32>
    %8 = arith.addf %6, %7 : vector<32x8xf32>
    %cst_7 = arith.constant 0.000000e+00 : f32
    %9 = vector.broadcast %cst_7 : f32 to vector<32x8xf32>
    %10 = arith.maximumf %8, %9 : vector<32x8xf32>
    %cst_8 = arith.constant 0.000000e+00 : bf16
    %11 = vector.broadcast %cst_8 : bf16 to vector<6x1x8xbf16>
    %c0_9 = arith.constant 0 : index
    %c0_10 = arith.constant 0 : index
    %c0_11 = arith.constant 0 : index
    %12 = vector.load %arg13[%c0_9, %c0_10, %c0_11] : memref<6x10x8xbf16, #tpu.memory_space<vmem>>, vector<6x1x8xbf16>
    tpu.vector_store %arg13[%c0_9, %c0_10, %c0_11], %11 {strides = array<i32>} : memref<6x10x8xbf16, #tpu.memory_space<vmem>>, vector<6x1x8xbf16>,
    %cst_12 = arith.constant 0.000000e+00 : bf16
    %13 = vector.broadcast %cst_12 : bf16 to vector<6x1x8xbf16>
    %c0_13 = arith.constant 0 : index
    %c9 = arith.constant 9 : index
    %c0_14 = arith.constant 0 : index
    %14 = vector.load %arg13[%c0_13, %c9, %c0_14] : memref<6x10x8xbf16, #tpu.memory_space<vmem>>, vector<6x1x8xbf16>
    tpu.vector_store %arg13[%c0_13, %c9, %c0_14], %13 {strides = array<i32>} : memref<6x10x8xbf16, #tpu.memory_space<vmem>>, vector<6x1x8xbf16>,
    %15 = vector.shape_cast %10 : vector<32x8xf32> to vector<4x8x8xf32>
    %16 = arith.truncf %15 : vector<4x8x8xf32> to vector<4x8x8xbf16>
    %c1 = arith.constant 1 : index
    %c1_15 = arith.constant 1 : index
    %c0_16 = arith.constant 0 : index
    %17 = vector.load %arg13[%c1, %c1_15, %c0_16] : memref<6x10x8xbf16, #tpu.memory_space<vmem>>, vector<4x8x8xbf16>
    tpu.vector_store %arg13[%c1, %c1_15, %c0_16], %16 {strides = array<i32>} : memref<6x10x8xbf16, #tpu.memory_space<vmem>>, vector<4x8x8xbf16>,
    %c0_17 = arith.constant 0 : index
    %c0_18 = arith.constant 0 : index
    %c0_19 = arith.constant 0 : index
    %c0_20 = arith.constant 0 : index
    %18 = vector.load %arg3[%c0_17, %c0_18, %c0_19, %c0_20] : memref<1x2x8x16xf32, #tpu.memory_space<vmem>>, vector<1x2x8x16xf32>
    %19 = vector.shape_cast %18 : vector<1x2x8x16xf32> to vector<2x8x16xf32>
    %c0_i32 = arith.constant 0 : i32
    %20 = arith.cmpi sgt, %arg1, %c0_i32 : i32
    %21 = arith.extui %20 : i1 to i32
    %c0_i32_21 = arith.constant 0 : i32
    %22 = arith.cmpi ne, %21, %c0_i32_21 : i32
    scf.if %22 {
      %102 = vector.extract_strided_slice %19 {offsets = [0, 0, 0], sizes = [1, 8, 16], strides = [1, 1, 1]} : vector<2x8x16xf32> to vector<1x8x16xf32>
      %103 = vector.shape_cast %102 : vector<1x8x16xf32> to vector<8x16xf32>
      %104 = arith.truncf %103 : vector<8x16xf32> to vector<8x16xbf16>
      %cst_91 = arith.constant dense<0.000000e+00> : vector<8x8xf32>
      %105 = tpu.matmul %104, %0, %cst_91 {dimension_numbers = #tpu.dot_dimension_numbers<[1], [0], [0], [1], [0, 0, 1, 1], [], []>} : vector<8x16xbf16>, vector<16x8xbf16>, vector<8x8xf32> -> vector<8x8xf32>
      %106 = vector.broadcast %1 : vector<1x8xf32> to vector<8x8xf32>
      %107 = arith.addf %105, %106 : vector<8x8xf32>
      %cst_92 = arith.constant 0.000000e+00 : f32
      %108 = vector.broadcast %cst_92 : f32 to vector<8x8xf32>
      %109 = arith.maximumf %107, %108 : vector<8x8xf32>
      %110 = vector.shape_cast %109 : vector<8x8xf32> to vector<1x8x8xf32>
      %111 = arith.truncf %110 : vector<1x8x8xf32> to vector<1x8x8xbf16>
      %c0_93 = arith.constant 0 : index
      %c1_94 = arith.constant 1 : index
      %c0_95 = arith.constant 0 : index
      %112 = vector.load %arg13[%c0_93, %c1_94, %c0_95] : memref<6x10x8xbf16, #tpu.memory_space<vmem>>, vector<1x8x8xbf16>
      tpu.vector_store %arg13[%c0_93, %c1_94, %c0_95], %111 {strides = array<i32>} : memref<6x10x8xbf16, #tpu.memory_space<vmem>>, vector<1x8x8xbf16>,
    } else {
    }
    %c0_i32_22 = arith.constant 0 : i32
    %23 = arith.cmpi eq, %arg1, %c0_i32_22 : i32
    %24 = arith.extui %23 : i1 to i32
    %c0_i32_23 = arith.constant 0 : i32
    %25 = arith.cmpi ne, %24, %c0_i32_23 : i32
    scf.if %25 {
      %cst_91 = arith.constant 0.000000e+00 : bf16
      %102 = vector.broadcast %cst_91 : bf16 to vector<1x8x8xbf16>
      %c0_92 = arith.constant 0 : index
      %c1_93 = arith.constant 1 : index
      %c0_94 = arith.constant 0 : index
      %103 = vector.load %arg13[%c0_92, %c1_93, %c0_94] : memref<6x10x8xbf16, #tpu.memory_space<vmem>>, vector<1x8x8xbf16>
      tpu.vector_store %arg13[%c0_92, %c1_93, %c0_94], %102 {strides = array<i32>} : memref<6x10x8xbf16, #tpu.memory_space<vmem>>, vector<1x8x8xbf16>,
    } else {
    }
    %c1_i32 = arith.constant 1 : i32
    %26 = arith.cmpi slt, %arg1, %c1_i32 : i32
    %27 = arith.extui %26 : i1 to i32
    %c0_i32_24 = arith.constant 0 : i32
    %28 = arith.cmpi ne, %27, %c0_i32_24 : i32
    scf.if %28 {
      %102 = vector.extract_strided_slice %19 {offsets = [1, 0, 0], sizes = [1, 8, 16], strides = [1, 1, 1]} : vector<2x8x16xf32> to vector<1x8x16xf32>
      %103 = vector.shape_cast %102 : vector<1x8x16xf32> to vector<8x16xf32>
      %104 = arith.truncf %103 : vector<8x16xf32> to vector<8x16xbf16>
      %cst_91 = arith.constant dense<0.000000e+00> : vector<8x8xf32>
      %105 = tpu.matmul %104, %0, %cst_91 {dimension_numbers = #tpu.dot_dimension_numbers<[1], [0], [0], [1], [0, 0, 1, 1], [], []>} : vector<8x16xbf16>, vector<16x8xbf16>, vector<8x8xf32> -> vector<8x8xf32>
      %106 = vector.broadcast %1 : vector<1x8xf32> to vector<8x8xf32>
      %107 = arith.addf %105, %106 : vector<8x8xf32>
      %cst_92 = arith.constant 0.000000e+00 : f32
      %108 = vector.broadcast %cst_92 : f32 to vector<8x8xf32>
      %109 = arith.maximumf %107, %108 : vector<8x8xf32>
      %110 = vector.shape_cast %109 : vector<8x8xf32> to vector<1x8x8xf32>
      %111 = arith.truncf %110 : vector<1x8x8xf32> to vector<1x8x8xbf16>
      %c5 = arith.constant 5 : index
      %c1_93 = arith.constant 1 : index
      %c0_94 = arith.constant 0 : index
      %112 = vector.load %arg13[%c5, %c1_93, %c0_94] : memref<6x10x8xbf16, #tpu.memory_space<vmem>>, vector<1x8x8xbf16>
      tpu.vector_store %arg13[%c5, %c1_93, %c0_94], %111 {strides = array<i32>} : memref<6x10x8xbf16, #tpu.memory_space<vmem>>, vector<1x8x8xbf16>,
    } else {
    }
    %c1_i32_25 = arith.constant 1 : i32
    %29 = arith.cmpi eq, %arg1, %c1_i32_25 : i32
    %30 = arith.extui %29 : i1 to i32
    %c0_i32_26 = arith.constant 0 : i32
    %31 = arith.cmpi ne, %30, %c0_i32_26 : i32
    scf.if %31 {
      %cst_91 = arith.constant 0.000000e+00 : bf16
      %102 = vector.broadcast %cst_91 : bf16 to vector<1x8x8xbf16>
      %c5 = arith.constant 5 : index
      %c1_92 = arith.constant 1 : index
      %c0_93 = arith.constant 0 : index
      %103 = vector.load %arg13[%c5, %c1_92, %c0_93] : memref<6x10x8xbf16, #tpu.memory_space<vmem>>, vector<1x8x8xbf16>
      tpu.vector_store %arg13[%c5, %c1_92, %c0_93], %102 {strides = array<i32>} : memref<6x10x8xbf16, #tpu.memory_space<vmem>>, vector<1x8x8xbf16>,
    } else {
    }
    %cst_27 = arith.constant 0.000000e+00 : f32
    %32 = vector.broadcast %cst_27 : f32 to vector<32x8xf32>
    %c0_28 = arith.constant 0 : index
    %c0_29 = arith.constant 0 : index
    %c0_30 = arith.constant 0 : index
    %33 = vector.load %arg13[%c0_28, %c0_29, %c0_30] : memref<6x10x8xbf16, #tpu.memory_space<vmem>>, vector<4x8x8xbf16>
    %c0_31 = arith.constant 0 : index
    %c0_32 = arith.constant 0 : index
    %34 = vector.load %arg6[%c0_31, %c0_32] : memref<72x8xbf16, #tpu.memory_space<vmem>>, vector<8x8xbf16>
    %35 = vector.shape_cast %33 : vector<4x8x8xbf16> to vector<32x8xbf16>
    %cst_33 = arith.constant dense<0.000000e+00> : vector<32x8xf32>
    %36 = tpu.matmul %35, %34, %cst_33 {dimension_numbers = #tpu.dot_dimension_numbers<[1], [0], [0], [1], [0, 0, 1, 1], [], []>} : vector<32x8xbf16>, vector<8x8xbf16>, vector<32x8xf32> -> vector<32x8xf32>
    %37 = arith.addf %32, %36 : vector<32x8xf32>
    %c0_34 = arith.constant 0 : index
    %c1_35 = arith.constant 1 : index
    %c0_36 = arith.constant 0 : index
    %38 = vector.load %arg13[%c0_34, %c1_35, %c0_36] : memref<6x10x8xbf16, #tpu.memory_space<vmem>>, vector<4x8x8xbf16>
    %c8 = arith.constant 8 : index
    %c0_37 = arith.constant 0 : index
    %39 = vector.load %arg6[%c8, %c0_37] : memref<72x8xbf16, #tpu.memory_space<vmem>>, vector<8x8xbf16>
    %40 = vector.shape_cast %38 : vector<4x8x8xbf16> to vector<32x8xbf16>
    %cst_38 = arith.constant dense<0.000000e+00> : vector<32x8xf32>
    %41 = tpu.matmul %40, %39, %cst_38 {dimension_numbers = #tpu.dot_dimension_numbers<[1], [0], [0], [1], [0, 0, 1, 1], [], []>} : vector<32x8xbf16>, vector<8x8xbf16>, vector<32x8xf32> -> vector<32x8xf32>
    %42 = arith.addf %37, %41 : vector<32x8xf32>
    %c0_39 = arith.constant 0 : index
    %c2 = arith.constant 2 : index
    %c0_40 = arith.constant 0 : index
    %43 = vector.load %arg13[%c0_39, %c2, %c0_40] : memref<6x10x8xbf16, #tpu.memory_space<vmem>>, vector<4x8x8xbf16>
    %c16 = arith.constant 16 : index
    %c0_41 = arith.constant 0 : index
    %44 = vector.load %arg6[%c16, %c0_41] : memref<72x8xbf16, #tpu.memory_space<vmem>>, vector<8x8xbf16>
    %45 = vector.shape_cast %43 : vector<4x8x8xbf16> to vector<32x8xbf16>
    %cst_42 = arith.constant dense<0.000000e+00> : vector<32x8xf32>
    %46 = tpu.matmul %45, %44, %cst_42 {dimension_numbers = #tpu.dot_dimension_numbers<[1], [0], [0], [1], [0, 0, 1, 1], [], []>} : vector<32x8xbf16>, vector<8x8xbf16>, vector<32x8xf32> -> vector<32x8xf32>
    %47 = arith.addf %42, %46 : vector<32x8xf32>
    %c1_43 = arith.constant 1 : index
    %c0_44 = arith.constant 0 : index
    %c0_45 = arith.constant 0 : index
    %48 = vector.load %arg13[%c1_43, %c0_44, %c0_45] : memref<6x10x8xbf16, #tpu.memory_space<vmem>>, vector<4x8x8xbf16>
    %c24 = arith.constant 24 : index
    %c0_46 = arith.constant 0 : index
    %49 = vector.load %arg6[%c24, %c0_46] : memref<72x8xbf16, #tpu.memory_space<vmem>>, vector<8x8xbf16>
    %50 = vector.shape_cast %48 : vector<4x8x8xbf16> to vector<32x8xbf16>
    %cst_47 = arith.constant dense<0.000000e+00> : vector<32x8xf32>
    %51 = tpu.matmul %50, %49, %cst_47 {dimension_numbers = #tpu.dot_dimension_numbers<[1], [0], [0], [1], [0, 0, 1, 1], [], []>} : vector<32x8xbf16>, vector<8x8xbf16>, vector<32x8xf32> -> vector<32x8xf32>
    %52 = arith.addf %47, %51 : vector<32x8xf32>
    %c1_48 = arith.constant 1 : index
    %c1_49 = arith.constant 1 : index
    %c0_50 = arith.constant 0 : index
    %53 = vector.load %arg13[%c1_48, %c1_49, %c0_50] : memref<6x10x8xbf16, #tpu.memory_space<vmem>>, vector<4x8x8xbf16>
    %c32 = arith.constant 32 : index
    %c0_51 = arith.constant 0 : index
    %54 = vector.load %arg6[%c32, %c0_51] : memref<72x8xbf16, #tpu.memory_space<vmem>>, vector<8x8xbf16>
    %55 = vector.shape_cast %53 : vector<4x8x8xbf16> to vector<32x8xbf16>
    %cst_52 = arith.constant dense<0.000000e+00> : vector<32x8xf32>
    %56 = tpu.matmul %55, %54, %cst_52 {dimension_numbers = #tpu.dot_dimension_numbers<[1], [0], [0], [1], [0, 0, 1, 1], [], []>} : vector<32x8xbf16>, vector<8x8xbf16>, vector<32x8xf32> -> vector<32x8xf32>
    %57 = arith.addf %52, %56 : vector<32x8xf32>
    %c1_53 = arith.constant 1 : index
    %c2_54 = arith.constant 2 : index
    %c0_55 = arith.constant 0 : index
    %58 = vector.load %arg13[%c1_53, %c2_54, %c0_55] : memref<6x10x8xbf16, #tpu.memory_space<vmem>>, vector<4x8x8xbf16>
    %c40 = arith.constant 40 : index
    %c0_56 = arith.constant 0 : index
    %59 = vector.load %arg6[%c40, %c0_56] : memref<72x8xbf16, #tpu.memory_space<vmem>>, vector<8x8xbf16>
    %60 = vector.shape_cast %58 : vector<4x8x8xbf16> to vector<32x8xbf16>
    %cst_57 = arith.constant dense<0.000000e+00> : vector<32x8xf32>
    %61 = tpu.matmul %60, %59, %cst_57 {dimension_numbers = #tpu.dot_dimension_numbers<[1], [0], [0], [1], [0, 0, 1, 1], [], []>} : vector<32x8xbf16>, vector<8x8xbf16>, vector<32x8xf32> -> vector<32x8xf32>
    %62 = arith.addf %57, %61 : vector<32x8xf32>
    %c2_58 = arith.constant 2 : index
    %c0_59 = arith.constant 0 : index
    %c0_60 = arith.constant 0 : index
    %63 = vector.load %arg13[%c2_58, %c0_59, %c0_60] : memref<6x10x8xbf16, #tpu.memory_space<vmem>>, vector<4x8x8xbf16>
    %c48 = arith.constant 48 : index
    %c0_61 = arith.constant 0 : index
    %64 = vector.load %arg6[%c48, %c0_61] : memref<72x8xbf16, #tpu.memory_space<vmem>>, vector<8x8xbf16>
    %65 = vector.shape_cast %63 : vector<4x8x8xbf16> to vector<32x8xbf16>
    %cst_62 = arith.constant dense<0.000000e+00> : vector<32x8xf32>
    %66 = tpu.matmul %65, %64, %cst_62 {dimension_numbers = #tpu.dot_dimension_numbers<[1], [0], [0], [1], [0, 0, 1, 1], [], []>} : vector<32x8xbf16>, vector<8x8xbf16>, vector<32x8xf32> -> vector<32x8xf32>
    %67 = arith.addf %62, %66 : vector<32x8xf32>
    %c2_63 = arith.constant 2 : index
    %c1_64 = arith.constant 1 : index
    %c0_65 = arith.constant 0 : index
    %68 = vector.load %arg13[%c2_63, %c1_64, %c0_65] : memref<6x10x8xbf16, #tpu.memory_space<vmem>>, vector<4x8x8xbf16>
    %c56 = arith.constant 56 : index
    %c0_66 = arith.constant 0 : index
    %69 = vector.load %arg6[%c56, %c0_66] : memref<72x8xbf16, #tpu.memory_space<vmem>>, vector<8x8xbf16>
    %70 = vector.shape_cast %68 : vector<4x8x8xbf16> to vector<32x8xbf16>
    %cst_67 = arith.constant dense<0.000000e+00> : vector<32x8xf32>
    %71 = tpu.matmul %70, %69, %cst_67 {dimension_numbers = #tpu.dot_dimension_numbers<[1], [0], [0], [1], [0, 0, 1, 1], [], []>} : vector<32x8xbf16>, vector<8x8xbf16>, vector<32x8xf32> -> vector<32x8xf32>
    %72 = arith.addf %67, %71 : vector<32x8xf32>
    %c2_68 = arith.constant 2 : index
    %c2_69 = arith.constant 2 : index
    %c0_70 = arith.constant 0 : index
    %73 = vector.load %arg13[%c2_68, %c2_69, %c0_70] : memref<6x10x8xbf16, #tpu.memory_space<vmem>>, vector<4x8x8xbf16>
    %c64 = arith.constant 64 : index
    %c0_71 = arith.constant 0 : index
    %74 = vector.load %arg6[%c64, %c0_71] : memref<72x8xbf16, #tpu.memory_space<vmem>>, vector<8x8xbf16>
    %75 = vector.shape_cast %73 : vector<4x8x8xbf16> to vector<32x8xbf16>
    %cst_72 = arith.constant dense<0.000000e+00> : vector<32x8xf32>
    %76 = tpu.matmul %75, %74, %cst_72 {dimension_numbers = #tpu.dot_dimension_numbers<[1], [0], [0], [1], [0, 0, 1, 1], [], []>} : vector<32x8xbf16>, vector<8x8xbf16>, vector<32x8xf32> -> vector<32x8xf32>
    %77 = arith.addf %72, %76 : vector<32x8xf32>
    %c0_73 = arith.constant 0 : index
    %c0_74 = arith.constant 0 : index
    %78 = vector.load %arg7[%c0_73, %c0_74] : memref<1x8xf32, #tpu.memory_space<vmem>>, vector<1x8xf32>
    %79 = vector.broadcast %78 : vector<1x8xf32> to vector<32x8xf32>
    %80 = arith.addf %77, %79 : vector<32x8xf32>
    %cst_75 = arith.constant 0.000000e+00 : f32
    %81 = vector.broadcast %cst_75 : f32 to vector<32x8xf32>
    %82 = arith.maximumf %80, %81 : vector<32x8xf32>
    %83 = arith.truncf %82 : vector<32x8xf32> to vector<32x8xbf16>
    %c0_76 = arith.constant 0 : index
    %c0_77 = arith.constant 0 : index
    %84 = vector.load %arg8[%c0_76, %c0_77] : memref<8x32xbf16, #tpu.memory_space<vmem>>, vector<8x32xbf16>
    %cst_78 = arith.constant dense<0.000000e+00> : vector<32x32xf32>
    %85 = tpu.matmul %83, %84, %cst_78 {dimension_numbers = #tpu.dot_dimension_numbers<[1], [0], [0], [1], [0, 0, 1, 1], [], []>} : vector<32x8xbf16>, vector<8x32xbf16>, vector<32x32xf32> -> vector<32x32xf32>
    %c0_79 = arith.constant 0 : index
    %c0_80 = arith.constant 0 : index
    %86 = vector.load %arg9[%c0_79, %c0_80] : memref<1x32xf32, #tpu.memory_space<vmem>>, vector<1x32xf32>
    %87 = vector.broadcast %86 : vector<1x32xf32> to vector<32x32xf32>
    %88 = arith.addf %85, %87 : vector<32x32xf32>
    %89 = arith.truncf %4 : vector<32x16xf32> to vector<32x16xbf16>
    %c0_81 = arith.constant 0 : index
    %c0_82 = arith.constant 0 : index
    %90 = vector.load %arg10[%c0_81, %c0_82] : memref<16x32xbf16, #tpu.memory_space<vmem>>, vector<16x32xbf16>
    %cst_83 = arith.constant dense<0.000000e+00> : vector<32x32xf32>
    %91 = tpu.matmul %89, %90, %cst_83 {dimension_numbers = #tpu.dot_dimension_numbers<[1], [0], [0], [1], [0, 0, 1, 1], [], []>} : vector<32x16xbf16>, vector<16x32xbf16>, vector<32x32xf32> -> vector<32x32xf32>
    %c0_84 = arith.constant 0 : index
    %c0_85 = arith.constant 0 : index
    %92 = vector.load %arg11[%c0_84, %c0_85] : memref<1x32xf32, #tpu.memory_space<vmem>>, vector<1x32xf32>
    %93 = vector.broadcast %92 : vector<1x32xf32> to vector<32x32xf32>
    %94 = arith.addf %91, %93 : vector<32x32xf32>
    %95 = arith.addf %88, %94 : vector<32x32xf32>
    %cst_86 = arith.constant 0.000000e+00 : f32
    %96 = vector.broadcast %cst_86 : f32 to vector<32x32xf32>
    %97 = arith.maximumf %95, %96 : vector<32x32xf32>
    %98 = vector.shape_cast %97 : vector<32x32xf32> to vector<4x8x32xf32>
    %c0_87 = arith.constant 0 : index
    %c0_88 = arith.constant 0 : index
    %c0_89 = arith.constant 0 : index
    %c0_90 = arith.constant 0 : index
    %99 = vector.load %arg12[%c0_87, %c0_88, %c0_89, %c0_90] : memref<1x4x8x32xf32, #tpu.memory_space<vmem>>, vector<1x4x8x32xf32>
    %100 = vector.shape_cast %99 : vector<1x4x8x32xf32> to vector<4x8x32xf32>
    %101 = vector.shape_cast %98 : vector<4x8x32xf32> to vector<1x4x8x32xf32>
    tpu.vector_store %arg12[%c0_87, %c0_88, %c0_89, %c0_90], %101 {strides = array<i32>} : memref<1x4x8x32xf32, #tpu.memory_space<vmem>>, vector<1x4x8x32xf32>,
    return
  }
  func.func @transform_0(%arg0: i32, %arg1: i32) -> (i32, i32, i32, i32) {
    %c0_i32 = arith.constant 0 : i32
    %c0_i32_0 = arith.constant 0 : i32
    %c0_i32_1 = arith.constant 0 : i32
    return %arg0, %arg1, %c0_i32, %c0_i32_0 : i32, i32, i32, i32
  }
  func.func @transform_1(%arg0: i32, %arg1: i32) -> (i32, i32, i32, i32) {
    %c0_i32 = arith.constant 0 : i32
    %c0_i32_0 = arith.constant 0 : i32
    %c0_i32_1 = arith.constant 0 : i32
    return %arg0, %arg1, %c0_i32, %c0_i32_0 : i32, i32, i32, i32
  }
  func.func @transform_2(%arg0: i32, %arg1: i32) -> (i32, i32) {
    %c0_i32 = arith.constant 0 : i32
    %c0_i32_0 = arith.constant 0 : i32
    %c0_i32_1 = arith.constant 0 : i32
    return %c0_i32, %c0_i32_0 : i32, i32
  }
  func.func @transform_3(%arg0: i32, %arg1: i32) -> (i32, i32) {
    %c0_i32 = arith.constant 0 : i32
    %c0_i32_0 = arith.constant 0 : i32
    %c0_i32_1 = arith.constant 0 : i32
    return %c0_i32, %c0_i32_0 : i32, i32
  }
  func.func @transform_4(%arg0: i32, %arg1: i32) -> (i32, i32) {
    %c0_i32 = arith.constant 0 : i32
    %c0_i32_0 = arith.constant 0 : i32
    %c0_i32_1 = arith.constant 0 : i32
    return %c0_i32, %c0_i32_0 : i32, i32
  }
  func.func @transform_5(%arg0: i32, %arg1: i32) -> (i32, i32) {
    %c0_i32 = arith.constant 0 : i32
    %c0_i32_0 = arith.constant 0 : i32
    %c0_i32_1 = arith.constant 0 : i32
    return %c0_i32, %c0_i32_0 : i32, i32
  }
  func.func @transform_6(%arg0: i32, %arg1: i32) -> (i32, i32) {
    %c0_i32 = arith.constant 0 : i32
    %c0_i32_0 = arith.constant 0 : i32
    %c0_i32_1 = arith.constant 0 : i32
    return %c0_i32, %c0_i32_0 : i32, i32
  }
  func.func @transform_7(%arg0: i32, %arg1: i32) -> (i32, i32) {
    %c0_i32 = arith.constant 0 : i32
    %c0_i32_0 = arith.constant 0 : i32
    %c0_i32_1 = arith.constant 0 : i32
    return %c0_i32, %c0_i32_0 : i32, i32
  }
  func.func @transform_8(%arg0: i32, %arg1: i32) -> (i32, i32) {
    %c0_i32 = arith.constant 0 : i32
    %c0_i32_0 = arith.constant 0 : i32
    %c0_i32_1 = arith.constant 0 : i32
    return %c0_i32, %c0_i32_0 : i32, i32
  }
  func.func @transform_9(%arg0: i32, %arg1: i32) -> (i32, i32) {
    %c0_i32 = arith.constant 0 : i32
    %c0_i32_0 = arith.constant 0 : i32
    %c0_i32_1 = arith.constant 0 : i32
    return %c0_i32, %c0_i32_0 : i32, i32
  }
  func.func @transform_10(%arg0: i32, %arg1: i32) -> (i32, i32, i32, i32) {
    %c0_i32 = arith.constant 0 : i32
    %c0_i32_0 = arith.constant 0 : i32
    %c0_i32_1 = arith.constant 0 : i32
    return %arg0, %arg1, %c0_i32, %c0_i32_0 : i32, i32, i32, i32
  }
}

</mosaic_0001>

<llo_original>
// kernel: tpu_custom_call.1
$region0: #{tpu_custom_call.1}
  #allocation0 [shape = 'u32[]', space=smem, size = 0x4, offset = 0x4, fixed_abs, tag = 'smem constant byte address 0x4 - core index']
  #allocation1 [shape = 'u32[144,128]{1,0:T(1,128)}', space=vmem, size = 0x12000, scoped, tag = 'internal scratch']
  #allocation2 [shape = 'bf16[6,10,8]{2,1,0:T(8,128)(2,1)}', space=vmem, size = 0x6000, scoped, tag = 'scratch operand']
  %s0 = inlined_call_operand.hbm [shape: f32[2,8,8,16], index: 0, kind: input, shape index: {}]
  %s1 = inlined_call_operand.hbm [shape: f32[2,4,8,16], index: 1, kind: input, shape index: {}]
  %s2 = inlined_call_operand.vmem [shape: bf16[16,8], index: 2, kind: input, shape index: {}]
  %s3 = inlined_call_operand.vmem [shape: f32[1,8], index: 3, kind: input, shape index: {}]
  %s4 = inlined_call_operand.vmem [shape: bf16[72,8], index: 4, kind: input, shape index: {}]
  %s5 = inlined_call_operand.vmem [shape: f32[1,8], index: 5, kind: input, shape index: {}]
  %s6 = inlined_call_operand.vmem [shape: bf16[8,32], index: 6, kind: input, shape index: {}]
  %s7 = inlined_call_operand.vmem [shape: f32[1,32], index: 7, kind: input, shape index: {}]
  %s8 = inlined_call_operand.vmem [shape: bf16[16,32], index: 8, kind: input, shape index: {}]
  %s9 = inlined_call_operand.vmem [shape: f32[1,32], index: 9, kind: input, shape index: {}]
  %s10 = inlined_call_operand.hbm [shape: f32[2,8,8,32], index: 10, kind: output, shape index: {}]
  %s11 = sld [smem:[#allocation0]]
  $region97: #{tpu_custom_call.1} parent=0
    _
  %s13 = ssub.s32 1, %s11
  %s14 = scalar_select 0, %s13, %s11
  $region1: #{tpu_custom_call.1} parent=0
    #allocation3 [shape = 'u8[32768]{0}', space=vmem, size = 0x8000, scoped, tag = 'input window, operand 0']
    #allocation4 [shape = 's32[2]{0}', space=sflag, size = 0x8, scoped, tag = 'scoped memory for tpu_custom_call.1']
    #allocation5 [shape = 's32[2]{0}', space=sflag, size = 0x8, scoped, tag = 'scoped memory for tpu_custom_call.1']
    #allocation6 [shape = 'u8[16384]{0}', space=vmem, size = 0x4000, scoped, tag = 'input window, operand 1']
    #allocation7 [shape = 's32[2]{0}', space=sflag, size = 0x8, scoped, tag = 'scoped memory for tpu_custom_call.1']
    #allocation8 [shape = 'u8[32768]{0}', space=vmem, size = 0x8000, scoped, tag = 'output window, operand 0']
    %15 = vsyncpa [#allocation4], 0
    %s16 = scalar_lea.sflag [#allocation4], 1
    %17 = vsyncpa %s16, 0
    %18 = vsyncpa [#allocation7], 0
    %s19 = scalar_lea.sflag [#allocation7], 1
    %20 = vsyncpa %s19, 0
    %21 = vsyncpa [#allocation5], 0
    %s22 = scalar_lea.sflag [#allocation5], 1
    %23 = vsyncpa %s22, 0
    loop: start=0, step=1, limit=6
    $region2: #{tpu_custom_call.1} parent=1 // loop_pre_header
      _
    $region3: #{tpu_custom_call.1} parent=1 // loop_header
      %s25 = sphi 0, %s29
      %p26 = scmp.ge.s32.totalorder %s25, 6
      %s32 = sphi 0, %s44
      %s33 = sphi 0, %s40
      %s34 = sphi 0, %s32
      %s35 = sphi 0, %s33
      %s36 = sphi 0, %s34
      %s37 = sphi 0, %s35
      %s49 = sphi 0, %s51
      %s52 = sphi 0, %s49
      %s53 = sphi 0, %s52
      %s69 = sphi 0, %s53
      %s77 = sphi 0, %s79
      %s80 = sphi 0, %s77
      %s81 = sphi 0, %s80
      %s97 = sphi 0, %s81
      %s101 = sphi 0, %s101
      %s103 = sphi 0, %s101
      %s104 = sphi 0, %s103
      %s118 = sphi 0, %s104
      %s122 = sphi 0, %s122
      %s124 = sphi 0, %s122
      %s125 = sphi 0, %s124
      %s139 = sphi 0, %s125
      %s143 = sphi 0, %s143
      %s145 = sphi 0, %s143
      %s146 = sphi 0, %s145
      %s160 = sphi 0, %s146
      %s164 = sphi 0, %s164
      %s166 = sphi 0, %s164
      %s167 = sphi 0, %s166
      %s181 = sphi 0, %s167
      %s185 = sphi 0, %s185
      %s187 = sphi 0, %s185
      %s188 = sphi 0, %s187
      %s202 = sphi 0, %s188
      %s206 = sphi 0, %s206
      %s208 = sphi 0, %s206
      %s209 = sphi 0, %s208
      %s223 = sphi 0, %s209
      %s227 = sphi 0, %s227
      %s229 = sphi 0, %s227
      %s230 = sphi 0, %s229
      %s244 = sphi 0, %s230
      %s248 = sphi 0, %s248
      %s250 = sphi 0, %s248
      %s251 = sphi 0, %s250
      %s265 = sphi 0, %s251
      %s273 = sphi 0, %s275
      %s276 = sphi 0, %s273
      %s277 = sphi 0, %s276
      %s293 = sphi 0, %s277
    $region4: #{tpu_custom_call.1} parent=1 // loop_header_branch
      %28 = sbr.rel (%p26) target = $region8
    $region5: #{tpu_custom_call.1} parent=1 // loop_body
      %s30 = ssub.s32 %s25, 1
      %s31 = ssub.s32 %s25, 2
      %s38 = sadd.s32 1, %s33
      %p39 = scmp.ge.s32.totalorder %s38, 2
      %s40 = scalar_select %p39, 0, %s38
      %s41 = sadd.s32 1, %s32
      %s42 = scalar_select %p39, %s41, %s32
      %p43 = scmp.ge.s32.totalorder %s42, 2
      %s44 = scalar_select %p43, 0, %s42
      %s45 = ssub.s32 %s32, %s44
      %s46 = ssub.s32 %s33, %s40
      %s47 = sor.u32 %s45, %s46
      %p48 = scmp.eq.s32.totalorder %s47, 0
      %s50 = sadd.s32 %s49, 1
      %s51 = scalar_select %p48, %s49, %s50
      %p54 = pneg %p48
      %p55 = scmp.eq.s32.totalorder %s25, 3
      %p56 = por %p54, %p55
      %p57 = scmp.ne.s32.totalorder %s49, %s52
      %p58 = scmp.eq.s32.totalorder %s25, 0
      %p59 = por %p57, %p58
      %p60 = scmp.ne.s32.totalorder %s49, %s52
      %p61 = scmp.eq.s32.totalorder %s30, 3
      %p62 = por %p60, %p61
      %p63 = scmp.ne.s32.totalorder %s52, %s53
      %p64 = scmp.eq.s32.totalorder %s30, 0
      %p65 = por %p63, %p64
      %p66 = scmp.ne.s32.totalorder %s52, %s53
      %p67 = scmp.eq.s32.totalorder %s31, 3
      %p68 = por %p66, %p67
      %p70 = scmp.ne.s32.totalorder %s53, %s69
      %p71 = scmp.eq.s32.totalorder %s31, 0
      %p72 = por %p70, %p71
      %s73 = ssub.s32 %s32, %s44
      %s74 = ssub.s32 %s33, %s40
      %s75 = sor.u32 %s73, %s74
      %p76 = scmp.eq.s32.totalorder %s75, 0
      %s78 = sadd.s32 %s77, 1
      %s79 = scalar_select %p76, %s77, %s78
      %p82 = pneg %p76
      %p83 = scmp.eq.s32.totalorder %s25, 3
      %p84 = por %p82, %p83
      %p85 = scmp.ne.s32.totalorder %s77, %s80
      %p86 = scmp.eq.s32.totalorder %s25, 0
      %p87 = por %p85, %p86
      %p88 = scmp.ne.s32.totalorder %s77, %s80
      %p89 = scmp.eq.s32.totalorder %s30, 3
      %p90 = por %p88, %p89
      %p91 = scmp.ne.s32.totalorder %s80, %s81
      %p92 = scmp.eq.s32.totalorder %s30, 0
      %p93 = por %p91, %p92
      %p94 = scmp.ne.s32.totalorder %s80, %s81
      %p95 = scmp.eq.s32.totalorder %s31, 3
      %p96 = por %p94, %p95
      %p98 = scmp.ne.s32.totalorder %s81, %s97
      %p99 = scmp.eq.s32.totalorder %s31, 0
      %p100 = por %p98, %p99
      %s102 = sadd.s32 %s101, 1
      %p105 = scmp.eq.s32.totalorder %s25, 3
      %p106 = scmp.ne.s32.totalorder %s101, %s103
      %p107 = scmp.eq.s32.totalorder %s25, 0
      %p108 = por %p106, %p107
      %p109 = scmp.ne.s32.totalorder %s101, %s103
      %p110 = scmp.eq.s32.totalorder %s30, 3
      %p111 = por %p109, %p110
      %p112 = scmp.ne.s32.totalorder %s103, %s104
      %p113 = scmp.eq.s32.totalorder %s30, 0
      %p114 = por %p112, %p113
      %p115 = scmp.ne.s32.totalorder %s103, %s104
      %p116 = scmp.eq.s32.totalorder %s31, 3
      %p117 = por %p115, %p116
      %p119 = scmp.ne.s32.totalorder %s104, %s118
      %p120 = scmp.eq.s32.totalorder %s31, 0
      %p121 = por %p119, %p120
      %s123 = sadd.s32 %s122, 1
      %p126 = scmp.eq.s32.totalorder %s25, 3
      %p127 = scmp.ne.s32.totalorder %s122, %s124
      %p128 = scmp.eq.s32.totalorder %s25, 0
      %p129 = por %p127, %p128
      %p130 = scmp.ne.s32.totalorder %s122, %s124
      %p131 = scmp.eq.s32.totalorder %s30, 3
      %p132 = por %p130, %p131
      %p133 = scmp.ne.s32.totalorder %s124, %s125
      %p134 = scmp.eq.s32.totalorder %s30, 0
      %p135 = por %p133, %p134
      %p136 = scmp.ne.s32.totalorder %s124, %s125
      %p137 = scmp.eq.s32.totalorder %s31, 3
      %p138 = por %p136, %p137
      %p140 = scmp.ne.s32.totalorder %s125, %s139
      %p141 = scmp.eq.s32.totalorder %s31, 0
      %p142 = por %p140, %p141
      %s144 = sadd.s32 %s143, 1
      %p147 = scmp.eq.s32.totalorder %s25, 3
      %p148 = scmp.ne.s32.totalorder %s143, %s145
      %p149 = scmp.eq.s32.totalorder %s25, 0
      %p150 = por %p148, %p149
      %p151 = scmp.ne.s32.totalorder %s143, %s145
      %p152 = scmp.eq.s32.totalorder %s30, 3
      %p153 = por %p151, %p152
      %p154 = scmp.ne.s32.totalorder %s145, %s146
      %p155 = scmp.eq.s32.totalorder %s30, 0
      %p156 = por %p154, %p155
      %p157 = scmp.ne.s32.totalorder %s145, %s146
      %p158 = scmp.eq.s32.totalorder %s31, 3
      %p159 = por %p157, %p158
      %p161 = scmp.ne.s32.totalorder %s146, %s160
      %p162 = scmp.eq.s32.totalorder %s31, 0
      %p163 = por %p161, %p162
      %s165 = sadd.s32 %s164, 1
      %p168 = scmp.eq.s32.totalorder %s25, 3
      %p169 = scmp.ne.s32.totalorder %s164, %s166
      %p170 = scmp.eq.s32.totalorder %s25, 0
      %p171 = por %p169, %p170
      %p172 = scmp.ne.s32.totalorder %s164, %s166
      %p173 = scmp.eq.s32.totalorder %s30, 3
      %p174 = por %p172, %p173
      %p175 = scmp.ne.s32.totalorder %s166, %s167
      %p176 = scmp.eq.s32.totalorder %s30, 0
      %p177 = por %p175, %p176
      %p178 = scmp.ne.s32.totalorder %s166, %s167
      %p179 = scmp.eq.s32.totalorder %s31, 3
      %p180 = por %p178, %p179
      %p182 = scmp.ne.s32.totalorder %s167, %s181
      %p183 = scmp.eq.s32.totalorder %s31, 0
      %p184 = por %p182, %p183
      %s186 = sadd.s32 %s185, 1
      %p189 = scmp.eq.s32.totalorder %s25, 3
      %p190 = scmp.ne.s32.totalorder %s185, %s187
      %p191 = scmp.eq.s32.totalorder %s25, 0
      %p192 = por %p190, %p191
      %p193 = scmp.ne.s32.totalorder %s185, %s187
      %p194 = scmp.eq.s32.totalorder %s30, 3
      %p195 = por %p193, %p194
      %p196 = scmp.ne.s32.totalorder %s187, %s188
      %p197 = scmp.eq.s32.totalorder %s30, 0
      %p198 = por %p196, %p197
      %p199 = scmp.ne.s32.totalorder %s187, %s188
      %p200 = scmp.eq.s32.totalorder %s31, 3
      %p201 = por %p199, %p200
      %p203 = scmp.ne.s32.totalorder %s188, %s202
      %p204 = scmp.eq.s32.totalorder %s31, 0
      %p205 = por %p203, %p204
      %s207 = sadd.s32 %s206, 1
      %p210 = scmp.eq.s32.totalorder %s25, 3
      %p211 = scmp.ne.s32.totalorder %s206, %s208
      %p212 = scmp.eq.s32.totalorder %s25, 0
      %p213 = por %p211, %p212
      %p214 = scmp.ne.s32.totalorder %s206, %s208
      %p215 = scmp.eq.s32.totalorder %s30, 3
      %p216 = por %p214, %p215
      %p217 = scmp.ne.s32.totalorder %s208, %s209
      %p218 = scmp.eq.s32.totalorder %s30, 0
      %p219 = por %p217, %p218
      %p220 = scmp.ne.s32.totalorder %s208, %s209
      %p221 = scmp.eq.s32.totalorder %s31, 3
      %p222 = por %p220, %p221
      %p224 = scmp.ne.s32.totalorder %s209, %s223
      %p225 = scmp.eq.s32.totalorder %s31, 0
      %p226 = por %p224, %p225
      %s228 = sadd.s32 %s227, 1
      %p231 = scmp.eq.s32.totalorder %s25, 3
      %p232 = scmp.ne.s32.totalorder %s227, %s229
      %p233 = scmp.eq.s32.totalorder %s25, 0
      %p234 = por %p232, %p233
      %p235 = scmp.ne.s32.totalorder %s227, %s229
      %p236 = scmp.eq.s32.totalorder %s30, 3
      %p237 = por %p235, %p236
      %p238 = scmp.ne.s32.totalorder %s229, %s230
      %p239 = scmp.eq.s32.totalorder %s30, 0
      %p240 = por %p238, %p239
      %p241 = scmp.ne.s32.totalorder %s229, %s230
      %p242 = scmp.eq.s32.totalorder %s31, 3
      %p243 = por %p241, %p242
      %p245 = scmp.ne.s32.totalorder %s230, %s244
      %p246 = scmp.eq.s32.totalorder %s31, 0
      %p247 = por %p245, %p246
      %s249 = sadd.s32 %s248, 1
      %p252 = scmp.eq.s32.totalorder %s25, 3
      %p253 = scmp.ne.s32.totalorder %s248, %s250
      %p254 = scmp.eq.s32.totalorder %s25, 0
      %p255 = por %p253, %p254
      %p256 = scmp.ne.s32.totalorder %s248, %s250
      %p257 = scmp.eq.s32.totalorder %s30, 3
      %p258 = por %p256, %p257
      %p259 = scmp.ne.s32.totalorder %s250, %s251
      %p260 = scmp.eq.s32.totalorder %s30, 0
      %p261 = por %p259, %p260
      %p262 = scmp.ne.s32.totalorder %s250, %s251
      %p263 = scmp.eq.s32.totalorder %s31, 3
      %p264 = por %p262, %p263
      %p266 = scmp.ne.s32.totalorder %s251, %s265
      %p267 = scmp.eq.s32.totalorder %s31, 0
      %p268 = por %p266, %p267
      %s269 = ssub.s32 %s32, %s44
      %s270 = ssub.s32 %s33, %s40
      %s271 = sor.u32 %s269, %s270
      %p272 = scmp.eq.s32.totalorder %s271, 0
      %s274 = sadd.s32 %s273, 1
      %s275 = scalar_select %p272, %s273, %s274
      %p278 = pneg %p272
      %p279 = scmp.eq.s32.totalorder %s25, 3
      %p280 = por %p278, %p279
      %p281 = scmp.ne.s32.totalorder %s273, %s276
      %p282 = scmp.eq.s32.totalorder %s25, 0
      %p283 = por %p281, %p282
      %p284 = scmp.ne.s32.totalorder %s273, %s276
      %p285 = scmp.eq.s32.totalorder %s30, 3
      %p286 = por %p284, %p285
      %p287 = scmp.ne.s32.totalorder %s276, %s277
      %p288 = scmp.eq.s32.totalorder %s30, 0
      %p289 = por %p287, %p288
      %p290 = scmp.ne.s32.totalorder %s276, %s277
      %p291 = scmp.eq.s32.totalorder %s31, 3
      %p292 = por %p290, %p291
      %p294 = scmp.ne.s32.totalorder %s277, %s293
      %p295 = scmp.eq.s32.totalorder %s31, 0
      %p296 = por %p294, %p295
      %p297 = scmp.le.s32.totalorder 1, %s25
      %p298 = scmp.lt.s32.totalorder %s25, 5
      %p299 = pnand %p297, %p298
      %p300 = pneg %p299
      // Predicated region
      $region9: #{tpu_custom_call.1} parent=5 // pred_check
        _
      $region10: #{tpu_custom_call.1} parent=5 // pred_check_branch
        %302 = sbr.rel (%p299) target = $region12
      $region11: #{tpu_custom_call.1} parent=5 // pred_region
        %s303 = ssub.s32 %s25, 1
        // Predicated region
        $region13: #{tpu_custom_call.1} parent=11 // pred_check
          %p304 = pneg %p114
        $region14: #{tpu_custom_call.1} parent=11 // pred_check_branch
          %306 = sbr.rel (%p304) target = $region16
        $region15: #{tpu_custom_call.1} parent=11 // pred_region
          _
        $region16: #{tpu_custom_call.1} parent=11 // pred_fallthru
          _
        // Predicated region
        $region17: #{tpu_custom_call.1} parent=11 // pred_check
          %p307 = pneg %p135
        $region18: #{tpu_custom_call.1} parent=11 // pred_check_branch
          %309 = sbr.rel (%p307) target = $region20
        $region19: #{tpu_custom_call.1} parent=11 // pred_region
          _
        $region20: #{tpu_custom_call.1} parent=11 // pred_fallthru
          _
        // Predicated region
        $region21: #{tpu_custom_call.1} parent=11 // pred_check
          %p310 = pneg %p156
        $region22: #{tpu_custom_call.1} parent=11 // pred_check_branch
          %312 = sbr.rel (%p310) target = $region24
        $region23: #{tpu_custom_call.1} parent=11 // pred_region
          _
        $region24: #{tpu_custom_call.1} parent=11 // pred_fallthru
          _
        // Predicated region
        $region25: #{tpu_custom_call.1} parent=11 // pred_check
          %p313 = pneg %p177
        $region26: #{tpu_custom_call.1} parent=11 // pred_check_branch
          %315 = sbr.rel (%p313) target = $region28
        $region27: #{tpu_custom_call.1} parent=11 // pred_region
          _
        $region28: #{tpu_custom_call.1} parent=11 // pred_fallthru
          _
        // Predicated region
        $region29: #{tpu_custom_call.1} parent=11 // pred_check
          %p316 = pneg %p198
        $region30: #{tpu_custom_call.1} parent=11 // pred_check_branch
          %318 = sbr.rel (%p316) target = $region32
        $region31: #{tpu_custom_call.1} parent=11 // pred_region
          _
        $region32: #{tpu_custom_call.1} parent=11 // pred_fallthru
          _
        // Predicated region
        $region33: #{tpu_custom_call.1} parent=11 // pred_check
          %p319 = pneg %p219
        $region34: #{tpu_custom_call.1} parent=11 // pred_check_branch
          %321 = sbr.rel (%p319) target = $region36
        $region35: #{tpu_custom_call.1} parent=11 // pred_region
          _
        $region36: #{tpu_custom_call.1} parent=11 // pred_fallthru
          _
        // Predicated region
        $region37: #{tpu_custom_call.1} parent=11 // pred_check
          %p322 = pneg %p240
        $region38: #{tpu_custom_call.1} parent=11 // pred_check_branch
          %324 = sbr.rel (%p322) target = $region40
        $region39: #{tpu_custom_call.1} parent=11 // pred_region
          _
        $region40: #{tpu_custom_call.1} parent=11 // pred_fallthru
          _
        // Predicated region
        $region41: #{tpu_custom_call.1} parent=11 // pred_check
          %p325 = pneg %p261
        $region42: #{tpu_custom_call.1} parent=11 // pred_check_branch
          %327 = sbr.rel (%p325) target = $region44
        $region43: #{tpu_custom_call.1} parent=11 // pred_region
          _
        $region44: #{tpu_custom_call.1} parent=11 // pred_fallthru
          _
      $region12: #{tpu_custom_call.1} parent=5 // pred_fallthru
        _
      %p328 = scmp.lt.s32.totalorder %s25, 4
      // Predicated region
      $region45: #{tpu_custom_call.1} parent=5 // pred_check
        %p329 = pneg %p328
      $region46: #{tpu_custom_call.1} parent=5 // pred_check_branch
        %331 = sbr.rel (%p329) target = $region48
      $region47: #{tpu_custom_call.1} parent=5 // pred_region
        // Predicated region
        $region49: #{tpu_custom_call.1} parent=47 // pred_check
          %p332 = pneg %p59
        $region50: #{tpu_custom_call.1} parent=47 // pred_check_branch
          %334 = sbr.rel (%p332) target = $region52
        $region51: #{tpu_custom_call.1} parent=47 // pred_region
          %s335 = sand.u32 %s49, 1
          %s336 = scalar_lea.sflag [#allocation4], %s335
          %s337 = sand.u32 %s49, 1
          %s338 = smul.addr %s337, 32
          %s339 = scalar_lea.vmem [#allocation3], %s338
          %s340 = smul.u32 4, %s33
          %s342 = ssub.s32 512, 512
          %343 = vsyncadd %s336, %s342
          %s344 = smul.addr %s32, 8
          %s345 = sadd.s32 %s340, %s344
          %s346 = smul.addr %s345, 128
          %s347 = scalar_lea.hbm %s0, %s346
          %s348 = sshll.u32 %s339, 4
          %s349 = int_to_ptr.vmem [resolvable:$true] %s348
          %354 = dma.hbm_to_vmem [thread:$0]  %s347, 512, %s349, %s336, 128, 128, 8
        $region52: #{tpu_custom_call.1} parent=47 // pred_fallthru
          _
        // Predicated region
        $region53: #{tpu_custom_call.1} parent=47 // pred_check
          %p355 = pneg %p87
        $region54: #{tpu_custom_call.1} parent=47 // pred_check_branch
          %357 = sbr.rel (%p355) target = $region56
        $region55: #{tpu_custom_call.1} parent=47 // pred_region
          %s358 = sand.u32 %s77, 1
          %s359 = scalar_lea.sflag [#allocation7], %s358
          %s360 = sand.u32 %s77, 1
          %s361 = smul.addr %s360, 16
          %s362 = scalar_lea.vmem [#allocation6], %s361
          %s363 = smul.u32 2, %s33
          %s365 = ssub.s32 256, 256
          %366 = vsyncadd %s359, %s365
          %s367 = smul.addr %s32, 4
          %s368 = sadd.s32 %s363, %s367
          %s369 = smul.addr %s368, 128
          %s370 = scalar_lea.hbm %s1, %s369
          %s371 = sshll.u32 %s362, 4
          %s372 = int_to_ptr.vmem [resolvable:$true] %s371
          %377 = dma.hbm_to_vmem [thread:$0]  %s370, 256, %s372, %s359, 128, 128, 8
        $region56: #{tpu_custom_call.1} parent=47 // pred_fallthru
          _
      $region48: #{tpu_custom_call.1} parent=5 // pred_fallthru
        _
      %p378 = scmp.le.s32.totalorder 1, %s25
      %p379 = scmp.lt.s32.totalorder %s25, 5
      %p380 = pnand %p378, %p379
      %p381 = pneg %p380
      // Predicated region
      $region57: #{tpu_custom_call.1} parent=5 // pred_check
        _
      $region58: #{tpu_custom_call.1} parent=5 // pred_check_branch
        %383 = sbr.rel (%p380) target = $region60
      $region59: #{tpu_custom_call.1} parent=5 // pred_region
        %s384 = ssub.s32 %s25, 1
        %s385 = sand.u32 %s52, 1
        %s386 = scalar_lea.sflag [#allocation4], %s385
        %s387 = sand.u32 %s52, 1
        %s388 = smul.addr %s387, 32
        %s389 = scalar_lea.vmem [#allocation3], %s388
        // Predicated region
        $region61: #{tpu_custom_call.1} parent=59 // pred_check
          %p390 = pneg %p65
        $region62: #{tpu_custom_call.1} parent=59 // pred_check_branch
          %392 = sbr.rel (%p390) target = $region64
        $region63: #{tpu_custom_call.1} parent=59 // pred_region
          %393 = dma.done %s386, 512
        $region64: #{tpu_custom_call.1} parent=59 // pred_fallthru
          _
        %s394 = sand.u32 %s80, 1
        %s395 = scalar_lea.sflag [#allocation7], %s394
        %s396 = sand.u32 %s80, 1
        %s397 = smul.addr %s396, 16
        %s398 = scalar_lea.vmem [#allocation6], %s397
        // Predicated region
        $region65: #{tpu_custom_call.1} parent=59 // pred_check
          %p399 = pneg %p93
        $region66: #{tpu_custom_call.1} parent=59 // pred_check_branch
          %401 = sbr.rel (%p399) target = $region68
        $region67: #{tpu_custom_call.1} parent=59 // pred_region
          %402 = dma.done %s395, 256
        $region68: #{tpu_custom_call.1} parent=59 // pred_fallthru
          _
        %s403 = sand.u32 %s52, 1
        %s404 = scalar_lea.sflag [#allocation4], %s403
        %s405 = sand.u32 %s52, 1
        %s406 = smul.addr %s405, 32
        %s407 = scalar_lea.vmem [#allocation3], %s406
        %p408 = pneg %p65
        %p409 = pneg %p62
        %s410 = sand.u32 %s80, 1
        %s411 = scalar_lea.sflag [#allocation7], %s410
        %s412 = sand.u32 %s80, 1
        %s413 = smul.addr %s412, 16
        %s414 = scalar_lea.vmem [#allocation6], %s413
        %p415 = pneg %p93
        %p416 = pneg %p90
        %p417 = pneg %p114
        %p418 = pneg %p111
        %p419 = pneg %p135
        %p420 = pneg %p132
        %p421 = pneg %p156
        %p422 = pneg %p153
        %p423 = pneg %p177
        %p424 = pneg %p174
        %p425 = pneg %p198
        %p426 = pneg %p195
        %p427 = pneg %p219
        %p428 = pneg %p216
        %p429 = pneg %p240
        %p430 = pneg %p237
        %p431 = pneg %p261
        %p432 = pneg %p258
        %p433 = pneg %p289
        %p434 = pneg %p286
        %s435 = sand.u32 %s276, 1
        %s436 = scalar_lea.sflag [#allocation5], %s435
        %s437 = sand.u32 %s276, 1
        %s438 = smul.addr %s437, 32
        %s439 = scalar_lea.vmem [#allocation8], %s438
        %s440 = smul.u32 4, %s35
        %s441 = smul.u32 2, %s35
        %s442 = smul.u32 4, %s35
        %v444 = vld [vmem:[%s2] sm:$0xf]
        %v445 = vld [vmem:[%s2 + $0x4] sm:$0xf]
        %v446 = vld [vmem:[%s3] sm:$0x1]
        %v447 = vld [vmem:[%s389] sm:$0xff]
        %v448 = vld [vmem:[%s389 + $0x8] sm:$0xff]
        %v449 = vld [vmem:[%s389 + $0x10] sm:$0xff]
        %v450 = vld [vmem:[%s389 + $0x18] sm:$0xff]
        %v451 = vpack.c.bf16 %v448, %v447
        %v452 = vpack.c.bf16 %v450, %v449
        %v454 = vlaneseq
        %v455 = vshrl.u32 %v454, 7
        %v456 = vsub.s32 0, %v455
        %v457 = vrot.slane %v446, %v456
        %v461 = vunpack.c.l.b16 %v444
        %v462 = vunpack.c.l.b16 %v445
        %v463 = vpack.c.b16 %v462, %v461
        %vm465 = vcmask 130048
        %v467 = vsel %vm465, %v451, 0
        %v470 = vsel %vm465, %v452, 0
        %472 = vmatprep.subr.bf16.mxu0 0
        %473 = vmatpush1.bf16.msra.mxu0 %v463
        %474 = vmatprep.subr.bf16.mxu0 0
        %475 = vmatpush1.bf16.msra.mxu0 0
        %476 = vmatprep.subr.bf16.mxu0 0
        %477 = vmatpush1.bf16.msra.mxu0 0
        %478 = vmatprep.subr.bf16.mxu0 0
        %479 = vmatpush1.bf16.msra.mxu0 0
        %480 = vmatprep.subr.bf16.mxu0 0
        %481 = vmatpush1.bf16.msra.mxu0 0
        %482 = vmatprep.subr.bf16.mxu0 0
        %483 = vmatpush1.bf16.msra.mxu0 0
        %484 = vmatprep.subr.bf16.mxu0 0
        %485 = vmatpush1.bf16.msra.mxu0 0
        %486 = vmatprep.subr.bf16.mxu0 0
        %487 = vmatpush1.bf16.msra.mxu0 0
        %488 = vmatprep.subr.bf16.mxu0 0
        %489 = vmatpush1.bf16.msra.mxu0 0
        %490 = vmatprep.subr.bf16.mxu0 0
        %491 = vmatpush1.bf16.msra.mxu0 0
        %492 = vmatprep.subr.bf16.mxu0 0
        %493 = vmatpush1.bf16.msra.mxu0 0
        %494 = vmatprep.subr.bf16.mxu0 0
        %495 = vmatpush1.bf16.msra.mxu0 0
        %496 = vmatprep.subr.bf16.mxu0 0
        %497 = vmatpush1.bf16.msra.mxu0 0
        %498 = vmatprep.subr.bf16.mxu0 0
        %499 = vmatpush1.bf16.msra.mxu0 0
        %500 = vmatprep.subr.bf16.mxu0 0
        %501 = vmatpush1.bf16.msra.mxu0 0
        %502 = vmatprep.subr.bf16.mxu0 0
        %503 = vmatpush1.bf16.msra.mxu0 0
        %504 = vmatprep.mubr.bf16.mxu0 0
        %505 = vmatmul.mubr.bf16.gmra.mrb[0].mxu0 %v467
        %v506 = vpop.f32.mrb[0].mxu0
        %v507 = vadd.f32 %v457, %v506
        %v508 = vpop.f32.mrb[0].mxu0
        %v509 = vpop.f32.mrb[0].mxu0
        %v510 = vadd.f32 %v457, %v509
        %v511 = vpop.f32.mrb[0].mxu0
        %512 = vmatprep.mubr.bf16.mxu0 0
        %513 = vmatmul.mubr.bf16.gmra.mrb[0].mxu0 %v470
        %v514 = vpop.f32.mrb[0].mxu0
        %v515 = vadd.f32 %v457, %v514
        %v516 = vpop.f32.mrb[0].mxu0
        %v517 = vpop.f32.mrb[0].mxu0
        %v518 = vadd.f32 %v457, %v517
        %v519 = vpop.f32.mrb[0].mxu0
        %520 = vdwg.mxu0
        %v521 = vmax.f32 %v507, 0.0
        %v522 = vmax.f32 %v510, 0.0
        %v523 = vmax.f32 %v515, 0.0
        %v524 = vmax.f32 %v518, 0.0
        %vm525 = vcmask 57344
        %vm526 = vsmask.f32 256
        %vm527 = vmand %vm525, %vm526
        %v528 = vld [vmem:[#allocation2] sm:$0x1]
        %v529 = vsel %vm527, 0, %v528
        %530 = vst [vmem:[#allocation2] sm:$0x1] %v529
        %v531 = vld [vmem:[#allocation2 + $0x8] sm:$0x1]
        %v532 = vsel %vm527, 0, %v531
        %533 = vst [vmem:[#allocation2 + $0x8] sm:$0x1] %v532
        %v534 = vld [vmem:[#allocation2 + $0x10] sm:$0x1]
        %v535 = vsel %vm527, 0, %v534
        %536 = vst [vmem:[#allocation2 + $0x10] sm:$0x1] %v535
        %v537 = vld [vmem:[#allocation2 + $0x18] sm:$0x1]
        %v538 = vsel %vm527, 0, %v537
        %539 = vst [vmem:[#allocation2 + $0x18] sm:$0x1] %v538
        %v540 = vld [vmem:[#allocation2 + $0x20] sm:$0x1]
        %v541 = vsel %vm527, 0, %v540
        %542 = vst [vmem:[#allocation2 + $0x20] sm:$0x1] %v541
        %v543 = vld [vmem:[#allocation2 + $0x28] sm:$0x1]
        %v544 = vsel %vm527, 0, %v543
        %545 = vst [vmem:[#allocation2 + $0x28] sm:$0x1] %v544
        %vm546 = vsmask.f32 7938
        %vm547 = vmand %vm525, %vm546
        %v548 = vld [vmem:[#allocation2 + $0x4] sm:$0x1]
        %v549 = vsel %vm547, 0, %v548
        %550 = vst [vmem:[#allocation2 + $0x4] sm:$0x1] %v549
        %v551 = vld [vmem:[#allocation2 + $0xc] sm:$0x1]
        %v552 = vsel %vm547, 0, %v551
        %553 = vst [vmem:[#allocation2 + $0xc] sm:$0x1] %v552
        %v554 = vld [vmem:[#allocation2 + $0x14] sm:$0x1]
        %v555 = vsel %vm547, 0, %v554
        %556 = vst [vmem:[#allocation2 + $0x14] sm:$0x1] %v555
        %v557 = vld [vmem:[#allocation2 + $0x1c] sm:$0x1]
        %v558 = vsel %vm547, 0, %v557
        %559 = vst [vmem:[#allocation2 + $0x1c] sm:$0x1] %v558
        %v560 = vld [vmem:[#allocation2 + $0x24] sm:$0x1]
        %v561 = vsel %vm547, 0, %v560
        %562 = vst [vmem:[#allocation2 + $0x24] sm:$0x1] %v561
        %v563 = vld [vmem:[#allocation2 + $0x2c] sm:$0x1]
        %v564 = vsel %vm547, 0, %v563
        %565 = vst [vmem:[#allocation2 + $0x2c] sm:$0x1] %v564
        %v566 = vpack.c.bf16 %v521, %v521
        %v567 = vpack.c.bf16 %v522, %v522
        %v568 = vpack.c.bf16 %v523, %v523
        %v569 = vpack.c.bf16 %v524, %v524
        %v574 = vunpack.c.l.b16 %v566
        %v575 = vunpack.c.l.b16 %v567
        %v576 = vunpack.c.l.b16 %v568
        %v577 = vunpack.c.l.b16 %v569
        %v578 = vpack.c.b16 %v574, %v574
        %v579 = vpack.c.b16 %v575, %v575
        %v580 = vpack.c.b16 %v576, %v576
        %v581 = vpack.c.b16 %v577, %v577
        %v583 = vshrl.u32 %v578, 16
        %v585 = vrot.slane %v583, 7
        %v586 = vshll.u32 %v578, 16
        %v588 = vor.u32 %v585, %v586
        %v589 = vrot.slane %v585, 4
        %v591 = vshrl.u32 %v579, 16
        %v593 = vrot.slane %v591, 7
        %v594 = vshll.u32 %v579, 16
        %v596 = vor.u32 %v593, %v594
        %v597 = vrot.slane %v593, 4
        %v599 = vshrl.u32 %v580, 16
        %v601 = vrot.slane %v599, 7
        %v602 = vshll.u32 %v580, 16
        %v604 = vor.u32 %v601, %v602
        %v605 = vrot.slane %v601, 4
        %v607 = vshrl.u32 %v581, 16
        %v609 = vrot.slane %v607, 7
        %v610 = vshll.u32 %v581, 16
        %v612 = vor.u32 %v609, %v610
        %v613 = vrot.slane %v609, 4
        %s622 = scalar_lea.vmem [#allocation2], 8
        %vm623 = vcmask 60416
        %vm624 = vmand %vm623, %vm546
        %v625 = vld [vmem:[%s622] sm:$0xf]
        %v626 = vsel %vm624, %v588, %v625
        %627 = vst [vmem:[%s622] sm:$0xf] %v626
        %v628 = vld [vmem:[%s622 + $0x4] sm:$0x1]
        %v629 = vsel %vm527, %v589, %v628
        %630 = vst [vmem:[%s622 + $0x4] sm:$0x1] %v629
        %v631 = vld [vmem:[%s622 + $0x8] sm:$0xf]
        %v632 = vsel %vm624, %v596, %v631
        %633 = vst [vmem:[%s622 + $0x8] sm:$0xf] %v632
        %v634 = vld [vmem:[%s622 + $0xc] sm:$0x1]
        %v635 = vsel %vm527, %v597, %v634
        %636 = vst [vmem:[%s622 + $0xc] sm:$0x1] %v635
        %v637 = vld [vmem:[%s622 + $0x10] sm:$0xf]
        %v638 = vsel %vm624, %v604, %v637
        %639 = vst [vmem:[%s622 + $0x10] sm:$0xf] %v638
        %v640 = vld [vmem:[%s622 + $0x14] sm:$0x1]
        %v641 = vsel %vm527, %v605, %v640
        %642 = vst [vmem:[%s622 + $0x14] sm:$0x1] %v641
        %v643 = vld [vmem:[%s622 + $0x18] sm:$0xf]
        %v644 = vsel %vm624, %v612, %v643
        %645 = vst [vmem:[%s622 + $0x18] sm:$0xf] %v644
        %v646 = vld [vmem:[%s622 + $0x1c] sm:$0x1]
        %v647 = vsel %vm527, %v613, %v646
        %648 = vst [vmem:[%s622 + $0x1c] sm:$0x1] %v647
        %v649 = vld [vmem:[%s398] sm:$0xff]
        %v650 = vld [vmem:[%s398 + $0x8] sm:$0xff]
        %p651 = scmp.gt.s32.totalorder %s35, 0
        // Predicated region
        $region69: #{tpu_custom_call.1} parent=59 // pred_check
          %p652 = pneg %p651
        $region70: #{tpu_custom_call.1} parent=59 // pred_check_branch
          %654 = sbr.rel (%p652) target = $region72
        $region71: #{tpu_custom_call.1} parent=59 // pred_region
          %v655 = vpack.c.bf16 %v649, %v649
          %v657 = vsel %vm465, %v655, 0
          %659 = vmatprep.subr.bf16.mxu0 0
          %660 = vmatpush1.bf16.msra.mxu0 %v463
          %661 = vmatprep.subr.bf16.mxu0 0
          %662 = vmatpush1.bf16.msra.mxu0 0
          %663 = vmatprep.subr.bf16.mxu0 0
          %664 = vmatpush1.bf16.msra.mxu0 0
          %665 = vmatprep.subr.bf16.mxu0 0
          %666 = vmatpush1.bf16.msra.mxu0 0
          %667 = vmatprep.subr.bf16.mxu0 0
          %668 = vmatpush1.bf16.msra.mxu0 0
          %669 = vmatprep.subr.bf16.mxu0 0
          %670 = vmatpush1.bf16.msra.mxu0 0
          %671 = vmatprep.subr.bf16.mxu0 0
          %672 = vmatpush1.bf16.msra.mxu0 0
          %673 = vmatprep.subr.bf16.mxu0 0
          %674 = vmatpush1.bf16.msra.mxu0 0
          %675 = vmatprep.subr.bf16.mxu0 0
          %676 = vmatpush1.bf16.msra.mxu0 0
          %677 = vmatprep.subr.bf16.mxu0 0
          %678 = vmatpush1.bf16.msra.mxu0 0
          %679 = vmatprep.subr.bf16.mxu0 0
          %680 = vmatpush1.bf16.msra.mxu0 0
          %681 = vmatprep.subr.bf16.mxu0 0
          %682 = vmatpush1.bf16.msra.mxu0 0
          %683 = vmatprep.subr.bf16.mxu0 0
          %684 = vmatpush1.bf16.msra.mxu0 0
          %685 = vmatprep.subr.bf16.mxu0 0
          %686 = vmatpush1.bf16.msra.mxu0 0
          %687 = vmatprep.subr.bf16.mxu0 0
          %688 = vmatpush1.bf16.msra.mxu0 0
          %689 = vmatprep.subr.bf16.mxu0 0
          %690 = vmatpush1.bf16.msra.mxu0 0
          %691 = vmatprep.mubr.bf16.mxu0 0
          %692 = vmatmul.mubr.bf16.gmra.mrb[0].mxu0 %v657
          %v693 = vpop.f32.mrb[0].mxu0
          %v694 = vadd.f32 %v457, %v693
          %v695 = vpop.f32.mrb[0].mxu0
          %v696 = vpop.f32.mrb[0].mxu0
          %v697 = vpop.f32.mrb[0].mxu0
          %698 = vdwg.mxu0
          %v699 = vmax.f32 %v694, 0.0
          %v700 = vpack.c.bf16 %v699, %v699
          %v702 = vunpack.c.l.b16 %v700
          %v703 = vpack.c.b16 %v702, %v702
          %v705 = vshrl.u32 %v703, 16
          %v707 = vrot.slane %v705, 7
          %v708 = vshll.u32 %v703, 16
          %v710 = vor.u32 %v707, %v708
          %v711 = vrot.slane %v707, 4
          %v714 = vld [vmem:[#allocation2] sm:$0xf]
          %v715 = vsel %vm624, %v710, %v714
          %716 = vst [vmem:[#allocation2] sm:$0xf] %v715
          %v717 = vld [vmem:[#allocation2 + $0x4] sm:$0x1]
          %v718 = vsel %vm527, %v711, %v717
          %719 = vst [vmem:[#allocation2 + $0x4] sm:$0x1] %v718
        $region72: #{tpu_custom_call.1} parent=59 // pred_fallthru
          _
        %p720 = scmp.eq.s32.totalorder %s35, 0
        // Predicated region
        $region73: #{tpu_custom_call.1} parent=59 // pred_check
          %p721 = pneg %p720
        $region74: #{tpu_custom_call.1} parent=59 // pred_check_branch
          %723 = sbr.rel (%p721) target = $region76
        $region75: #{tpu_custom_call.1} parent=59 // pred_region
          %v724 = vld [vmem:[#allocation2] sm:$0xf]
          %v725 = vsel %vm624, 0, %v724
          %726 = vst [vmem:[#allocation2] sm:$0xf] %v725
          %v727 = vld [vmem:[#allocation2 + $0x4] sm:$0x1]
          %v728 = vsel %vm527, 0, %v727
          %729 = vst [vmem:[#allocation2 + $0x4] sm:$0x1] %v728
        $region76: #{tpu_custom_call.1} parent=59 // pred_fallthru
          _
        %p730 = scmp.lt.s32.totalorder %s35, 1
        // Predicated region
        $region77: #{tpu_custom_call.1} parent=59 // pred_check
          %p731 = pneg %p730
        $region78: #{tpu_custom_call.1} parent=59 // pred_check_branch
          %733 = sbr.rel (%p731) target = $region80
        $region79: #{tpu_custom_call.1} parent=59 // pred_region
          %v734 = vpack.c.bf16 %v650, %v650
          %v736 = vsel %vm465, %v734, 0
          %738 = vmatprep.subr.bf16.mxu0 0
          %739 = vmatpush1.bf16.msra.mxu0 %v463
          %740 = vmatprep.subr.bf16.mxu0 0
          %741 = vmatpush1.bf16.msra.mxu0 0
          %742 = vmatprep.subr.bf16.mxu0 0
          %743 = vmatpush1.bf16.msra.mxu0 0
          %744 = vmatprep.subr.bf16.mxu0 0
          %745 = vmatpush1.bf16.msra.mxu0 0
          %746 = vmatprep.subr.bf16.mxu0 0
          %747 = vmatpush1.bf16.msra.mxu0 0
          %748 = vmatprep.subr.bf16.mxu0 0
          %749 = vmatpush1.bf16.msra.mxu0 0
          %750 = vmatprep.subr.bf16.mxu0 0
          %751 = vmatpush1.bf16.msra.mxu0 0
          %752 = vmatprep.subr.bf16.mxu0 0
          %753 = vmatpush1.bf16.msra.mxu0 0
          %754 = vmatprep.subr.bf16.mxu0 0
          %755 = vmatpush1.bf16.msra.mxu0 0
          %756 = vmatprep.subr.bf16.mxu0 0
          %757 = vmatpush1.bf16.msra.mxu0 0
          %758 = vmatprep.subr.bf16.mxu0 0
          %759 = vmatpush1.bf16.msra.mxu0 0
          %760 = vmatprep.subr.bf16.mxu0 0
          %761 = vmatpush1.bf16.msra.mxu0 0
          %762 = vmatprep.subr.bf16.mxu0 0
          %763 = vmatpush1.bf16.msra.mxu0 0
          %764 = vmatprep.subr.bf16.mxu0 0
          %765 = vmatpush1.bf16.msra.mxu0 0
          %766 = vmatprep.subr.bf16.mxu0 0
          %767 = vmatpush1.bf16.msra.mxu0 0
          %768 = vmatprep.subr.bf16.mxu0 0
          %769 = vmatpush1.bf16.msra.mxu0 0
          %770 = vmatprep.mubr.bf16.mxu0 0
          %771 = vmatmul.mubr.bf16.gmra.mrb[0].mxu0 %v736
          %v772 = vpop.f32.mrb[0].mxu0
          %v773 = vadd.f32 %v457, %v772
          %v774 = vpop.f32.mrb[0].mxu0
          %v775 = vpop.f32.mrb[0].mxu0
          %v776 = vpop.f32.mrb[0].mxu0
          %777 = vdwg.mxu0
          %v778 = vmax.f32 %v773, 0.0
          %v779 = vpack.c.bf16 %v778, %v778
          %v781 = vunpack.c.l.b16 %v779
          %v782 = vpack.c.b16 %v781, %v781
          %v784 = vshrl.u32 %v782, 16
          %v786 = vrot.slane %v784, 7
          %v787 = vshll.u32 %v782, 16
          %v789 = vor.u32 %v786, %v787
          %v790 = vrot.slane %v786, 4
          %s793 = scalar_lea.vmem [#allocation2], 40
          %v794 = vld [vmem:[%s793] sm:$0xf]
          %v795 = vsel %vm624, %v789, %v794
          %796 = vst [vmem:[%s793] sm:$0xf] %v795
          %v797 = vld [vmem:[%s793 + $0x4] sm:$0x1]
          %v798 = vsel %vm527, %v790, %v797
          %799 = vst [vmem:[%s793 + $0x4] sm:$0x1] %v798
        $region80: #{tpu_custom_call.1} parent=59 // pred_fallthru
          _
        %p800 = scmp.eq.s32.totalorder %s35, 1
        // Predicated region
        $region81: #{tpu_custom_call.1} parent=59 // pred_check
          %p801 = pneg %p800
        $region82: #{tpu_custom_call.1} parent=59 // pred_check_branch
          %803 = sbr.rel (%p801) target = $region84
        $region83: #{tpu_custom_call.1} parent=59 // pred_region
          %s804 = scalar_lea.vmem [#allocation2], 40
          %v805 = vld [vmem:[%s804] sm:$0xf]
          %v806 = vsel %vm624, 0, %v805
          %807 = vst [vmem:[%s804] sm:$0xf] %v806
          %v808 = vld [vmem:[%s804 + $0x4] sm:$0x1]
          %v809 = vsel %vm527, 0, %v808
          %810 = vst [vmem:[%s804 + $0x4] sm:$0x1] %v809
        $region84: #{tpu_custom_call.1} parent=59 // pred_fallthru
          _
        %v811 = vld [vmem:[#allocation2] sm:$0xf]
        %v812 = vld [vmem:[#allocation2 + $0x8] sm:$0xf]
        %v813 = vld [vmem:[#allocation2 + $0x10] sm:$0xf]
        %v814 = vld [vmem:[#allocation2 + $0x18] sm:$0xf]
        %v815 = vld [vmem:[%s4] sm:$0xf]
        %v816 = vld [vmem:[#allocation2 + $0x4] sm:$0x1]
        %v817 = vld [vmem:[#allocation2 + $0xc] sm:$0x1]
        %v818 = vld [vmem:[#allocation2 + $0x14] sm:$0x1]
        %v819 = vld [vmem:[#allocation2 + $0x1c] sm:$0x1]
        %v820 = vld [vmem:[%s4 + $0x4] sm:$0xf]
        %vm821 = vsmask.f32 3328
        %vm822 = vsmask.f32 7440
        %vm823 = vmor %vm821, %vm822
        %v825 = vshrl.u32 %v811, 16
        %v827 = vrot.slane %v825, 4
        %v828 = vshll.u32 %v811, 16
        %v830 = vrot.slane %v828, 5
        %v831 = vor.u32 %v827, %v830
        %v832 = vrot.slane %v831, 4
        %v834 = vshll.u32 %v816, 16
        %v836 = vrot.slane %v834, 5
        %v837 = vsel %vm823, %v832, %v836
        %v839 = vshrl.u32 %v812, 16
        %v841 = vrot.slane %v839, 4
        %v842 = vshll.u32 %v812, 16
        %v844 = vrot.slane %v842, 5
        %v845 = vor.u32 %v841, %v844
        %v846 = vrot.slane %v845, 4
        %v848 = vshll.u32 %v817, 16
        %v850 = vrot.slane %v848, 5
        %v851 = vsel %vm823, %v846, %v850
        %v853 = vshrl.u32 %v813, 16
        %v855 = vrot.slane %v853, 4
        %v856 = vshll.u32 %v813, 16
        %v858 = vrot.slane %v856, 5
        %v859 = vor.u32 %v855, %v858
        %v860 = vrot.slane %v859, 4
        %v862 = vshll.u32 %v818, 16
        %v864 = vrot.slane %v862, 5
        %v865 = vsel %vm823, %v860, %v864
        %v867 = vshrl.u32 %v814, 16
        %v869 = vrot.slane %v867, 4
        %v870 = vshll.u32 %v814, 16
        %v872 = vrot.slane %v870, 5
        %v873 = vor.u32 %v869, %v872
        %v874 = vrot.slane %v873, 4
        %v876 = vshll.u32 %v819, 16
        %v878 = vrot.slane %v876, 5
        %v879 = vsel %vm823, %v874, %v878
        %v880 = vunpack.c.l.b16 %v837
        %v881 = vunpack.c.l.b16 %v851
        %v882 = vunpack.c.l.b16 %v865
        %v883 = vunpack.c.l.b16 %v879
        %v884 = vpack.c.b16 %v881, %v880
        %v885 = vpack.c.b16 %v883, %v882
        %vm886 = vcmask 64512
        %v888 = vsel %vm886, %v884, 0
        %v891 = vsel %vm886, %v885, 0
        %vm893 = vcmask 1043456
        %v895 = vsel %vm893, %v820, 0
        %897 = vmatprep.subr.bf16.mxu0 0
        %898 = vmatpush1.bf16.msra.mxu0 %v895
        %899 = vmatprep.subr.bf16.mxu0 0
        %900 = vmatpush1.bf16.msra.mxu0 0
        %901 = vmatprep.subr.bf16.mxu0 0
        %902 = vmatpush1.bf16.msra.mxu0 0
        %903 = vmatprep.subr.bf16.mxu0 0
        %904 = vmatpush1.bf16.msra.mxu0 0
        %905 = vmatprep.subr.bf16.mxu0 0
        %906 = vmatpush1.bf16.msra.mxu0 0
        %907 = vmatprep.subr.bf16.mxu0 0
        %908 = vmatpush1.bf16.msra.mxu0 0
        %909 = vmatprep.subr.bf16.mxu0 0
        %910 = vmatpush1.bf16.msra.mxu0 0
        %911 = vmatprep.subr.bf16.mxu0 0
        %912 = vmatpush1.bf16.msra.mxu0 0
        %913 = vmatprep.subr.bf16.mxu0 0
        %914 = vmatpush1.bf16.msra.mxu0 0
        %915 = vmatprep.subr.bf16.mxu0 0
        %916 = vmatpush1.bf16.msra.mxu0 0
        %917 = vmatprep.subr.bf16.mxu0 0
        %918 = vmatpush1.bf16.msra.mxu0 0
        %919 = vmatprep.subr.bf16.mxu0 0
        %920 = vmatpush1.bf16.msra.mxu0 0
        %921 = vmatprep.subr.bf16.mxu0 0
        %922 = vmatpush1.bf16.msra.mxu0 0
        %923 = vmatprep.subr.bf16.mxu0 0
        %924 = vmatpush1.bf16.msra.mxu0 0
        %925 = vmatprep.subr.bf16.mxu0 0
        %926 = vmatpush1.bf16.msra.mxu0 0
        %927 = vmatprep.subr.bf16.mxu0 0
        %928 = vmatpush1.bf16.msra.mxu0 0
        %929 = vmatprep.mubr.bf16.mxu0 0
        %930 = vmatmul.mubr.bf16.gmra.mrb[0].mxu0 %v888
        %v931 = vpop.f32.mrb[0].mxu0
        %v932 = vadd.f32 0.0, %v931
        %v933 = vpop.f32.mrb[0].mxu0
        %v934 = vpop.f32.mrb[0].mxu0
        %v935 = vadd.f32 0.0, %v934
        %v936 = vpop.f32.mrb[0].mxu0
        %937 = vmatprep.mubr.bf16.mxu0 0
        %938 = vmatmul.mubr.bf16.gmra.mrb[0].mxu0 %v891
        %v939 = vpop.f32.mrb[0].mxu0
        %v940 = vadd.f32 0.0, %v939
        %v941 = vpop.f32.mrb[0].mxu0
        %v942 = vpop.f32.mrb[0].mxu0
        %v943 = vadd.f32 0.0, %v942
        %v944 = vpop.f32.mrb[0].mxu0
        %945 = vdwg.mxu0
        %v950 = vunpack.c.l.b16 %v811
        %v951 = vunpack.c.l.b16 %v812
        %v952 = vunpack.c.l.b16 %v813
        %v953 = vunpack.c.l.b16 %v814
        %v954 = vpack.c.b16 %v951, %v950
        %v955 = vpack.c.b16 %v953, %v952
        %v957 = vsel %vm886, %v954, 0
        %v960 = vsel %vm886, %v955, 0
        %v963 = vsel %vm893, %v815, 0
        %965 = vmatprep.subr.bf16.mxu0 0
        %966 = vmatpush1.bf16.msra.mxu0 %v963
        %967 = vmatprep.subr.bf16.mxu0 0
        %968 = vmatpush1.bf16.msra.mxu0 0
        %969 = vmatprep.subr.bf16.mxu0 0
        %970 = vmatpush1.bf16.msra.mxu0 0
        %971 = vmatprep.subr.bf16.mxu0 0
        %972 = vmatpush1.bf16.msra.mxu0 0
        %973 = vmatprep.subr.bf16.mxu0 0
        %974 = vmatpush1.bf16.msra.mxu0 0
        %975 = vmatprep.subr.bf16.mxu0 0
        %976 = vmatpush1.bf16.msra.mxu0 0
        %977 = vmatprep.subr.bf16.mxu0 0
        %978 = vmatpush1.bf16.msra.mxu0 0
        %979 = vmatprep.subr.bf16.mxu0 0
        %980 = vmatpush1.bf16.msra.mxu0 0
        %981 = vmatprep.subr.bf16.mxu0 0
        %982 = vmatpush1.bf16.msra.mxu0 0
        %983 = vmatprep.subr.bf16.mxu0 0
        %984 = vmatpush1.bf16.msra.mxu0 0
        %985 = vmatprep.subr.bf16.mxu0 0
        %986 = vmatpush1.bf16.msra.mxu0 0
        %987 = vmatprep.subr.bf16.mxu0 0
        %988 = vmatpush1.bf16.msra.mxu0 0
        %989 = vmatprep.subr.bf16.mxu0 0
        %990 = vmatpush1.bf16.msra.mxu0 0
        %991 = vmatprep.subr.bf16.mxu0 0
        %992 = vmatpush1.bf16.msra.mxu0 0
        %993 = vmatprep.subr.bf16.mxu0 0
        %994 = vmatpush1.bf16.msra.mxu0 0
        %995 = vmatprep.subr.bf16.mxu0 0
        %996 = vmatpush1.bf16.msra.mxu0 0
        %997 = vmatprep.mubr.bf16.mxu0 0
        %998 = vmatmul.mubr.bf16.gmra.mrb[0].mxu0 %v957
        %v999 = vpop.f32.mrb[0].mxu0
        %v1000 = vadd.f32 %v932, %v999
        %v1001 = vpop.f32.mrb[0].mxu0
        %v1002 = vpop.f32.mrb[0].mxu0
        %v1003 = vadd.f32 %v935, %v1002
        %v1004 = vpop.f32.mrb[0].mxu0
        %1005 = vmatprep.mubr.bf16.mxu0 0
        %1006 = vmatmul.mubr.bf16.gmra.mrb[0].mxu0 %v960
        %v1007 = vpop.f32.mrb[0].mxu0
        %v1008 = vadd.f32 %v940, %v1007
        %v1009 = vpop.f32.mrb[0].mxu0
        %v1010 = vpop.f32.mrb[0].mxu0
        %v1011 = vadd.f32 %v943, %v1010
        %v1012 = vpop.f32.mrb[0].mxu0
        %1013 = vdwg.mxu0
        %v1014 = vld [vmem:[#allocation2] sm:$0xe]
        %v1015 = vld [vmem:[#allocation2 + $0x8] sm:$0xe]
        %v1016 = vld [vmem:[#allocation2 + $0x10] sm:$0xe]
        %v1017 = vld [vmem:[#allocation2 + $0x18] sm:$0xe]
        %v1018 = vld [vmem:[%s4 + $0x8] sm:$0xf]
        %vm1027 = vcmask 1042432
        %vm1028 = vcmask 1046532
        %vm1029 = vmor %vm1027, %vm1028
        %v1030 = vrot.slane %v1014, 5
        %v1031 = vrot.slane %v1030, 4
        %v1032 = vrot.slane %v816, 5
        %v1033 = vsel %vm1029, %v1031, %v1032
        %v1034 = vrot.slane %v1015, 5
        %v1035 = vrot.slane %v1034, 4
        %v1036 = vrot.slane %v817, 5
        %v1037 = vsel %vm1029, %v1035, %v1036
        %v1038 = vrot.slane %v1016, 5
        %v1039 = vrot.slane %v1038, 4
        %v1040 = vrot.slane %v818, 5
        %v1041 = vsel %vm1029, %v1039, %v1040
        %v1042 = vrot.slane %v1017, 5
        %v1043 = vrot.slane %v1042, 4
        %v1044 = vrot.slane %v819, 5
        %v1045 = vsel %vm1029, %v1043, %v1044
        %v1046 = vunpack.c.l.b16 %v1033
        %v1047 = vunpack.c.l.b16 %v1037
        %v1048 = vunpack.c.l.b16 %v1041
        %v1049 = vunpack.c.l.b16 %v1045
        %v1050 = vpack.c.b16 %v1047, %v1046
        %v1051 = vpack.c.b16 %v1049, %v1048
        %v1053 = vsel %vm886, %v1050, 0
        %v1056 = vsel %vm886, %v1051, 0
        %v1059 = vsel %vm893, %v1018, 0
        %1061 = vmatprep.subr.bf16.mxu0 0
        %1062 = vmatpush1.bf16.msra.mxu0 %v1059
        %1063 = vmatprep.subr.bf16.mxu0 0
        %1064 = vmatpush1.bf16.msra.mxu0 0
        %1065 = vmatprep.subr.bf16.mxu0 0
        %1066 = vmatpush1.bf16.msra.mxu0 0
        %1067 = vmatprep.subr.bf16.mxu0 0
        %1068 = vmatpush1.bf16.msra.mxu0 0
        %1069 = vmatprep.subr.bf16.mxu0 0
        %1070 = vmatpush1.bf16.msra.mxu0 0
        %1071 = vmatprep.subr.bf16.mxu0 0
        %1072 = vmatpush1.bf16.msra.mxu0 0
        %1073 = vmatprep.subr.bf16.mxu0 0
        %1074 = vmatpush1.bf16.msra.mxu0 0
        %1075 = vmatprep.subr.bf16.mxu0 0
        %1076 = vmatpush1.bf16.msra.mxu0 0
        %1077 = vmatprep.subr.bf16.mxu0 0
        %1078 = vmatpush1.bf16.msra.mxu0 0
        %1079 = vmatprep.subr.bf16.mxu0 0
        %1080 = vmatpush1.bf16.msra.mxu0 0
        %1081 = vmatprep.subr.bf16.mxu0 0
        %1082 = vmatpush1.bf16.msra.mxu0 0
        %1083 = vmatprep.subr.bf16.mxu0 0
        %1084 = vmatpush1.bf16.msra.mxu0 0
        %1085 = vmatprep.subr.bf16.mxu0 0
        %1086 = vmatpush1.bf16.msra.mxu0 0
        %1087 = vmatprep.subr.bf16.mxu0 0
        %1088 = vmatpush1.bf16.msra.mxu0 0
        %1089 = vmatprep.subr.bf16.mxu0 0
        %1090 = vmatpush1.bf16.msra.mxu0 0
        %1091 = vmatprep.subr.bf16.mxu0 0
        %1092 = vmatpush1.bf16.msra.mxu0 0
        %1093 = vmatprep.mubr.bf16.mxu0 0
        %1094 = vmatmul.mubr.bf16.gmra.mrb[0].mxu0 %v1053
        %v1095 = vpop.f32.mrb[0].mxu0
        %v1096 = vadd.f32 0.0, %v1095
        %v1097 = vpop.f32.mrb[0].mxu0
        %v1098 = vpop.f32.mrb[0].mxu0
        %v1099 = vadd.f32 0.0, %v1098
        %v1100 = vpop.f32.mrb[0].mxu0
        %1101 = vmatprep.mubr.bf16.mxu0 0
        %1102 = vmatmul.mubr.bf16.gmra.mrb[0].mxu0 %v1056
        %v1103 = vpop.f32.mrb[0].mxu0
        %v1104 = vadd.f32 0.0, %v1103
        %v1105 = vpop.f32.mrb[0].mxu0
        %v1106 = vpop.f32.mrb[0].mxu0
        %v1107 = vadd.f32 0.0, %v1106
        %v1108 = vpop.f32.mrb[0].mxu0
        %1109 = vdwg.mxu0
        %v1110 = vadd.f32 %v1000, %v1096
        %v1111 = vadd.f32 %v1003, %v1099
        %v1112 = vadd.f32 %v1008, %v1104
        %v1113 = vadd.f32 %v1011, %v1107
        %v1114 = vld [vmem:[%s622] sm:$0xf]
        %v1115 = vld [vmem:[%s622 + $0x8] sm:$0xf]
        %v1116 = vld [vmem:[%s622 + $0x10] sm:$0xf]
        %v1117 = vld [vmem:[%s622 + $0x18] sm:$0xf]
        %v1118 = vld [vmem:[%s4 + $0xc] sm:$0xf]
        %v1123 = vunpack.c.l.b16 %v1114
        %v1124 = vunpack.c.l.b16 %v1115
        %v1125 = vunpack.c.l.b16 %v1116
        %v1126 = vunpack.c.l.b16 %v1117
        %v1127 = vpack.c.b16 %v1124, %v1123
        %v1128 = vpack.c.b16 %v1126, %v1125
        %v1130 = vsel %vm886, %v1127, 0
        %v1133 = vsel %vm886, %v1128, 0
        %v1136 = vsel %vm893, %v1118, 0
        %1138 = vmatprep.subr.bf16.mxu0 0
        %1139 = vmatpush1.bf16.msra.mxu0 %v1136
        %1140 = vmatprep.subr.bf16.mxu0 0
        %1141 = vmatpush1.bf16.msra.mxu0 0
        %1142 = vmatprep.subr.bf16.mxu0 0
        %1143 = vmatpush1.bf16.msra.mxu0 0
        %1144 = vmatprep.subr.bf16.mxu0 0
        %1145 = vmatpush1.bf16.msra.mxu0 0
        %1146 = vmatprep.subr.bf16.mxu0 0
        %1147 = vmatpush1.bf16.msra.mxu0 0
        %1148 = vmatprep.subr.bf16.mxu0 0
        %1149 = vmatpush1.bf16.msra.mxu0 0
        %1150 = vmatprep.subr.bf16.mxu0 0
        %1151 = vmatpush1.bf16.msra.mxu0 0
        %1152 = vmatprep.subr.bf16.mxu0 0
        %1153 = vmatpush1.bf16.msra.mxu0 0
        %1154 = vmatprep.subr.bf16.mxu0 0
        %1155 = vmatpush1.bf16.msra.mxu0 0
        %1156 = vmatprep.subr.bf16.mxu0 0
        %1157 = vmatpush1.bf16.msra.mxu0 0
        %1158 = vmatprep.subr.bf16.mxu0 0
        %1159 = vmatpush1.bf16.msra.mxu0 0
        %1160 = vmatprep.subr.bf16.mxu0 0
        %1161 = vmatpush1.bf16.msra.mxu0 0
        %1162 = vmatprep.subr.bf16.mxu0 0
        %1163 = vmatpush1.bf16.msra.mxu0 0
        %1164 = vmatprep.subr.bf16.mxu0 0
        %1165 = vmatpush1.bf16.msra.mxu0 0
        %1166 = vmatprep.subr.bf16.mxu0 0
        %1167 = vmatpush1.bf16.msra.mxu0 0
        %1168 = vmatprep.subr.bf16.mxu0 0
        %1169 = vmatpush1.bf16.msra.mxu0 0
        %1170 = vmatprep.mubr.bf16.mxu0 0
        %1171 = vmatmul.mubr.bf16.gmra.mrb[0].mxu0 %v1130
        %v1172 = vpop.f32.mrb[0].mxu0
        %v1173 = vadd.f32 0.0, %v1172
        %v1174 = vpop.f32.mrb[0].mxu0
        %v1175 = vpop.f32.mrb[0].mxu0
        %v1176 = vadd.f32 0.0, %v1175
        %v1177 = vpop.f32.mrb[0].mxu0
        %1178 = vmatprep.mubr.bf16.mxu0 0
        %1179 = vmatmul.mubr.bf16.gmra.mrb[0].mxu0 %v1133
        %v1180 = vpop.f32.mrb[0].mxu0
        %v1181 = vadd.f32 0.0, %v1180
        %v1182 = vpop.f32.mrb[0].mxu0
        %v1183 = vpop.f32.mrb[0].mxu0
        %v1184 = vadd.f32 0.0, %v1183
        %v1185 = vpop.f32.mrb[0].mxu0
        %1186 = vdwg.mxu0
        %v1187 = vadd.f32 %v1110, %v1173
        %v1188 = vadd.f32 %v1111, %v1176
        %v1189 = vadd.f32 %v1112, %v1181
        %v1190 = vadd.f32 %v1113, %v1184
        %v1191 = vld [vmem:[%s622] sm:$0xf]
        %v1192 = vld [vmem:[%s622 + $0x4] sm:$0x1]
        %v1193 = vld [vmem:[%s622 + $0x8] sm:$0xf]
        %v1194 = vld [vmem:[%s622 + $0xc] sm:$0x1]
        %v1195 = vld [vmem:[%s622 + $0x10] sm:$0xf]
        %v1196 = vld [vmem:[%s622 + $0x14] sm:$0x1]
        %v1197 = vld [vmem:[%s622 + $0x18] sm:$0xf]
        %v1198 = vld [vmem:[%s622 + $0x1c] sm:$0x1]
        %v1199 = vld [vmem:[%s4 + $0x10] sm:$0xf]
        %v1201 = vshrl.u32 %v1191, 16
        %v1203 = vrot.slane %v1201, 4
        %v1204 = vshll.u32 %v1191, 16
        %v1206 = vrot.slane %v1204, 5
        %v1207 = vor.u32 %v1203, %v1206
        %v1208 = vrot.slane %v1207, 4
        %v1210 = vshll.u32 %v1192, 16
        %v1212 = vrot.slane %v1210, 5
        %v1213 = vsel %vm823, %v1208, %v1212
        %v1215 = vshrl.u32 %v1193, 16
        %v1217 = vrot.slane %v1215, 4
        %v1218 = vshll.u32 %v1193, 16
        %v1220 = vrot.slane %v1218, 5
        %v1221 = vor.u32 %v1217, %v1220
        %v1222 = vrot.slane %v1221, 4
        %v1224 = vshll.u32 %v1194, 16
        %v1226 = vrot.slane %v1224, 5
        %v1227 = vsel %vm823, %v1222, %v1226
        %v1229 = vshrl.u32 %v1195, 16
        %v1231 = vrot.slane %v1229, 4
        %v1232 = vshll.u32 %v1195, 16
        %v1234 = vrot.slane %v1232, 5
        %v1235 = vor.u32 %v1231, %v1234
        %v1236 = vrot.slane %v1235, 4
        %v1238 = vshll.u32 %v1196, 16
        %v1240 = vrot.slane %v1238, 5
        %v1241 = vsel %vm823, %v1236, %v1240
        %v1243 = vshrl.u32 %v1197, 16
        %v1245 = vrot.slane %v1243, 4
        %v1246 = vshll.u32 %v1197, 16
        %v1248 = vrot.slane %v1246, 5
        %v1249 = vor.u32 %v1245, %v1248
        %v1250 = vrot.slane %v1249, 4
        %v1252 = vshll.u32 %v1198, 16
        %v1254 = vrot.slane %v1252, 5
        %v1255 = vsel %vm823, %v1250, %v1254
        %v1256 = vunpack.c.l.b16 %v1213
        %v1257 = vunpack.c.l.b16 %v1227
        %v1258 = vunpack.c.l.b16 %v1241
        %v1259 = vunpack.c.l.b16 %v1255
        %v1260 = vpack.c.b16 %v1257, %v1256
        %v1261 = vpack.c.b16 %v1259, %v1258
        %v1263 = vsel %vm886, %v1260, 0
        %v1266 = vsel %vm886, %v1261, 0
        %v1269 = vsel %vm893, %v1199, 0
        %1271 = vmatprep.subr.bf16.mxu0 0
        %1272 = vmatpush1.bf16.msra.mxu0 %v1269
        %1273 = vmatprep.subr.bf16.mxu0 0
        %1274 = vmatpush1.bf16.msra.mxu0 0
        %1275 = vmatprep.subr.bf16.mxu0 0
        %1276 = vmatpush1.bf16.msra.mxu0 0
        %1277 = vmatprep.subr.bf16.mxu0 0
        %1278 = vmatpush1.bf16.msra.mxu0 0
        %1279 = vmatprep.subr.bf16.mxu0 0
        %1280 = vmatpush1.bf16.msra.mxu0 0
        %1281 = vmatprep.subr.bf16.mxu0 0
        %1282 = vmatpush1.bf16.msra.mxu0 0
        %1283 = vmatprep.subr.bf16.mxu0 0
        %1284 = vmatpush1.bf16.msra.mxu0 0
        %1285 = vmatprep.subr.bf16.mxu0 0
        %1286 = vmatpush1.bf16.msra.mxu0 0
        %1287 = vmatprep.subr.bf16.mxu0 0
        %1288 = vmatpush1.bf16.msra.mxu0 0
        %1289 = vmatprep.subr.bf16.mxu0 0
        %1290 = vmatpush1.bf16.msra.mxu0 0
        %1291 = vmatprep.subr.bf16.mxu0 0
        %1292 = vmatpush1.bf16.msra.mxu0 0
        %1293 = vmatprep.subr.bf16.mxu0 0
        %1294 = vmatpush1.bf16.msra.mxu0 0
        %1295 = vmatprep.subr.bf16.mxu0 0
        %1296 = vmatpush1.bf16.msra.mxu0 0
        %1297 = vmatprep.subr.bf16.mxu0 0
        %1298 = vmatpush1.bf16.msra.mxu0 0
        %1299 = vmatprep.subr.bf16.mxu0 0
        %1300 = vmatpush1.bf16.msra.mxu0 0
        %1301 = vmatprep.subr.bf16.mxu0 0
        %1302 = vmatpush1.bf16.msra.mxu0 0
        %1303 = vmatprep.mubr.bf16.mxu0 0
        %1304 = vmatmul.mubr.bf16.gmra.mrb[0].mxu0 %v1263
        %v1305 = vpop.f32.mrb[0].mxu0
        %v1306 = vadd.f32 0.0, %v1305
        %v1307 = vpop.f32.mrb[0].mxu0
        %v1308 = vpop.f32.mrb[0].mxu0
        %v1309 = vadd.f32 0.0, %v1308
        %v1310 = vpop.f32.mrb[0].mxu0
        %1311 = vmatprep.mubr.bf16.mxu0 0
        %1312 = vmatmul.mubr.bf16.gmra.mrb[0].mxu0 %v1266
        %v1313 = vpop.f32.mrb[0].mxu0
        %v1314 = vadd.f32 0.0, %v1313
        %v1315 = vpop.f32.mrb[0].mxu0
        %v1316 = vpop.f32.mrb[0].mxu0
        %v1317 = vadd.f32 0.0, %v1316
        %v1318 = vpop.f32.mrb[0].mxu0
        %1319 = vdwg.mxu0
        %v1320 = vadd.f32 %v1187, %v1306
        %v1321 = vadd.f32 %v1188, %v1309
        %v1322 = vadd.f32 %v1189, %v1314
        %v1323 = vadd.f32 %v1190, %v1317
        %v1324 = vld [vmem:[%s622] sm:$0xe]
        %v1325 = vld [vmem:[%s622 + $0x8] sm:$0xe]
        %v1326 = vld [vmem:[%s622 + $0x10] sm:$0xe]
        %v1327 = vld [vmem:[%s622 + $0x18] sm:$0xe]
        %v1328 = vld [vmem:[%s4 + $0x14] sm:$0xf]
        %v1337 = vrot.slane %v1324, 5
        %v1338 = vrot.slane %v1337, 4
        %v1339 = vrot.slane %v1192, 5
        %v1340 = vsel %vm1029, %v1338, %v1339
        %v1341 = vrot.slane %v1325, 5
        %v1342 = vrot.slane %v1341, 4
        %v1343 = vrot.slane %v1194, 5
        %v1344 = vsel %vm1029, %v1342, %v1343
        %v1345 = vrot.slane %v1326, 5
        %v1346 = vrot.slane %v1345, 4
        %v1347 = vrot.slane %v1196, 5
        %v1348 = vsel %vm1029, %v1346, %v1347
        %v1349 = vrot.slane %v1327, 5
        %v1350 = vrot.slane %v1349, 4
        %v1351 = vrot.slane %v1198, 5
        %v1352 = vsel %vm1029, %v1350, %v1351
        %v1353 = vunpack.c.l.b16 %v1340
        %v1354 = vunpack.c.l.b16 %v1344
        %v1355 = vunpack.c.l.b16 %v1348
        %v1356 = vunpack.c.l.b16 %v1352
        %v1357 = vpack.c.b16 %v1354, %v1353
        %v1358 = vpack.c.b16 %v1356, %v1355
        %v1360 = vsel %vm886, %v1357, 0
        %v1363 = vsel %vm886, %v1358, 0
        %v1366 = vsel %vm893, %v1328, 0
        %1368 = vmatprep.subr.bf16.mxu0 0
        %1369 = vmatpush1.bf16.msra.mxu0 %v1366
        %1370 = vmatprep.subr.bf16.mxu0 0
        %1371 = vmatpush1.bf16.msra.mxu0 0
        %1372 = vmatprep.subr.bf16.mxu0 0
        %1373 = vmatpush1.bf16.msra.mxu0 0
        %1374 = vmatprep.subr.bf16.mxu0 0
        %1375 = vmatpush1.bf16.msra.mxu0 0
        %1376 = vmatprep.subr.bf16.mxu0 0
        %1377 = vmatpush1.bf16.msra.mxu0 0
        %1378 = vmatprep.subr.bf16.mxu0 0
        %1379 = vmatpush1.bf16.msra.mxu0 0
        %1380 = vmatprep.subr.bf16.mxu0 0
        %1381 = vmatpush1.bf16.msra.mxu0 0
        %1382 = vmatprep.subr.bf16.mxu0 0
        %1383 = vmatpush1.bf16.msra.mxu0 0
        %1384 = vmatprep.subr.bf16.mxu0 0
        %1385 = vmatpush1.bf16.msra.mxu0 0
        %1386 = vmatprep.subr.bf16.mxu0 0
        %1387 = vmatpush1.bf16.msra.mxu0 0
        %1388 = vmatprep.subr.bf16.mxu0 0
        %1389 = vmatpush1.bf16.msra.mxu0 0
        %1390 = vmatprep.subr.bf16.mxu0 0
        %1391 = vmatpush1.bf16.msra.mxu0 0
        %1392 = vmatprep.subr.bf16.mxu0 0
        %1393 = vmatpush1.bf16.msra.mxu0 0
        %1394 = vmatprep.subr.bf16.mxu0 0
        %1395 = vmatpush1.bf16.msra.mxu0 0
        %1396 = vmatprep.subr.bf16.mxu0 0
        %1397 = vmatpush1.bf16.msra.mxu0 0
        %1398 = vmatprep.subr.bf16.mxu0 0
        %1399 = vmatpush1.bf16.msra.mxu0 0
        %1400 = vmatprep.mubr.bf16.mxu0 0
        %1401 = vmatmul.mubr.bf16.gmra.mrb[0].mxu0 %v1360
        %v1402 = vpop.f32.mrb[0].mxu0
        %v1403 = vadd.f32 0.0, %v1402
        %v1404 = vpop.f32.mrb[0].mxu0
        %v1405 = vpop.f32.mrb[0].mxu0
        %v1406 = vadd.f32 0.0, %v1405
        %v1407 = vpop.f32.mrb[0].mxu0
        %1408 = vmatprep.mubr.bf16.mxu0 0
        %1409 = vmatmul.mubr.bf16.gmra.mrb[0].mxu0 %v1363
        %v1410 = vpop.f32.mrb[0].mxu0
        %v1411 = vadd.f32 0.0, %v1410
        %v1412 = vpop.f32.mrb[0].mxu0
        %v1413 = vpop.f32.mrb[0].mxu0
        %v1414 = vadd.f32 0.0, %v1413
        %v1415 = vpop.f32.mrb[0].mxu0
        %1416 = vdwg.mxu0
        %v1417 = vadd.f32 %v1320, %v1403
        %v1418 = vadd.f32 %v1321, %v1406
        %v1419 = vadd.f32 %v1322, %v1411
        %v1420 = vadd.f32 %v1323, %v1414
        %s1421 = scalar_lea.vmem [#allocation2], 16
        %v1422 = vld [vmem:[%s1421] sm:$0xf]
        %v1423 = vld [vmem:[%s1421 + $0x8] sm:$0xf]
        %v1424 = vld [vmem:[%s1421 + $0x10] sm:$0xf]
        %v1425 = vld [vmem:[%s1421 + $0x18] sm:$0xf]
        %v1426 = vld [vmem:[%s4 + $0x18] sm:$0xf]
        %v1431 = vunpack.c.l.b16 %v1422
        %v1432 = vunpack.c.l.b16 %v1423
        %v1433 = vunpack.c.l.b16 %v1424
        %v1434 = vunpack.c.l.b16 %v1425
        %v1435 = vpack.c.b16 %v1432, %v1431
        %v1436 = vpack.c.b16 %v1434, %v1433
        %v1438 = vsel %vm886, %v1435, 0
        %v1441 = vsel %vm886, %v1436, 0
        %v1444 = vsel %vm893, %v1426, 0
        %1446 = vmatprep.subr.bf16.mxu0 0
        %1447 = vmatpush1.bf16.msra.mxu0 %v1444
        %1448 = vmatprep.subr.bf16.mxu0 0
        %1449 = vmatpush1.bf16.msra.mxu0 0
        %1450 = vmatprep.subr.bf16.mxu0 0
        %1451 = vmatpush1.bf16.msra.mxu0 0
        %1452 = vmatprep.subr.bf16.mxu0 0
        %1453 = vmatpush1.bf16.msra.mxu0 0
        %1454 = vmatprep.subr.bf16.mxu0 0
        %1455 = vmatpush1.bf16.msra.mxu0 0
        %1456 = vmatprep.subr.bf16.mxu0 0
        %1457 = vmatpush1.bf16.msra.mxu0 0
        %1458 = vmatprep.subr.bf16.mxu0 0
        %1459 = vmatpush1.bf16.msra.mxu0 0
        %1460 = vmatprep.subr.bf16.mxu0 0
        %1461 = vmatpush1.bf16.msra.mxu0 0
        %1462 = vmatprep.subr.bf16.mxu0 0
        %1463 = vmatpush1.bf16.msra.mxu0 0
        %1464 = vmatprep.subr.bf16.mxu0 0
        %1465 = vmatpush1.bf16.msra.mxu0 0
        %1466 = vmatprep.subr.bf16.mxu0 0
        %1467 = vmatpush1.bf16.msra.mxu0 0
        %1468 = vmatprep.subr.bf16.mxu0 0
        %1469 = vmatpush1.bf16.msra.mxu0 0
        %1470 = vmatprep.subr.bf16.mxu0 0
        %1471 = vmatpush1.bf16.msra.mxu0 0
        %1472 = vmatprep.subr.bf16.mxu0 0
        %1473 = vmatpush1.bf16.msra.mxu0 0
        %1474 = vmatprep.subr.bf16.mxu0 0
        %1475 = vmatpush1.bf16.msra.mxu0 0
        %1476 = vmatprep.subr.bf16.mxu0 0
        %1477 = vmatpush1.bf16.msra.mxu0 0
        %1478 = vmatprep.mubr.bf16.mxu0 0
        %1479 = vmatmul.mubr.bf16.gmra.mrb[0].mxu0 %v1438
        %v1480 = vpop.f32.mrb[0].mxu0
        %v1481 = vadd.f32 0.0, %v1480
        %v1482 = vpop.f32.mrb[0].mxu0
        %v1483 = vpop.f32.mrb[0].mxu0
        %v1484 = vadd.f32 0.0, %v1483
        %v1485 = vpop.f32.mrb[0].mxu0
        %1486 = vmatprep.mubr.bf16.mxu0 0
        %1487 = vmatmul.mubr.bf16.gmra.mrb[0].mxu0 %v1441
        %v1488 = vpop.f32.mrb[0].mxu0
        %v1489 = vadd.f32 0.0, %v1488
        %v1490 = vpop.f32.mrb[0].mxu0
        %v1491 = vpop.f32.mrb[0].mxu0
        %v1492 = vadd.f32 0.0, %v1491
        %v1493 = vpop.f32.mrb[0].mxu0
        %1494 = vdwg.mxu0
        %v1495 = vadd.f32 %v1417, %v1481
        %v1496 = vadd.f32 %v1418, %v1484
        %v1497 = vadd.f32 %v1419, %v1489
        %v1498 = vadd.f32 %v1420, %v1492
        %v1499 = vld [vmem:[%s1421] sm:$0xf]
        %v1500 = vld [vmem:[%s1421 + $0x4] sm:$0x1]
        %v1501 = vld [vmem:[%s1421 + $0x8] sm:$0xf]
        %v1502 = vld [vmem:[%s1421 + $0xc] sm:$0x1]
        %v1503 = vld [vmem:[%s1421 + $0x10] sm:$0xf]
        %v1504 = vld [vmem:[%s1421 + $0x14] sm:$0x1]
        %v1505 = vld [vmem:[%s1421 + $0x18] sm:$0xf]
        %v1506 = vld [vmem:[%s1421 + $0x1c] sm:$0x1]
        %v1507 = vld [vmem:[%s4 + $0x1c] sm:$0xf]
        %v1509 = vshrl.u32 %v1499, 16
        %v1511 = vrot.slane %v1509, 4
        %v1512 = vshll.u32 %v1499, 16
        %v1514 = vrot.slane %v1512, 5
        %v1515 = vor.u32 %v1511, %v1514
        %v1516 = vrot.slane %v1515, 4
        %v1518 = vshll.u32 %v1500, 16
        %v1520 = vrot.slane %v1518, 5
        %v1521 = vsel %vm823, %v1516, %v1520
        %v1523 = vshrl.u32 %v1501, 16
        %v1525 = vrot.slane %v1523, 4
        %v1526 = vshll.u32 %v1501, 16
        %v1528 = vrot.slane %v1526, 5
        %v1529 = vor.u32 %v1525, %v1528
        %v1530 = vrot.slane %v1529, 4
        %v1532 = vshll.u32 %v1502, 16
        %v1534 = vrot.slane %v1532, 5
        %v1535 = vsel %vm823, %v1530, %v1534
        %v1537 = vshrl.u32 %v1503, 16
        %v1539 = vrot.slane %v1537, 4
        %v1540 = vshll.u32 %v1503, 16
        %v1542 = vrot.slane %v1540, 5
        %v1543 = vor.u32 %v1539, %v1542
        %v1544 = vrot.slane %v1543, 4
        %v1546 = vshll.u32 %v1504, 16
        %v1548 = vrot.slane %v1546, 5
        %v1549 = vsel %vm823, %v1544, %v1548
        %v1551 = vshrl.u32 %v1505, 16
        %v1553 = vrot.slane %v1551, 4
        %v1554 = vshll.u32 %v1505, 16
        %v1556 = vrot.slane %v1554, 5
        %v1557 = vor.u32 %v1553, %v1556
        %v1558 = vrot.slane %v1557, 4
        %v1560 = vshll.u32 %v1506, 16
        %v1562 = vrot.slane %v1560, 5
        %v1563 = vsel %vm823, %v1558, %v1562
        %v1564 = vunpack.c.l.b16 %v1521
        %v1565 = vunpack.c.l.b16 %v1535
        %v1566 = vunpack.c.l.b16 %v1549
        %v1567 = vunpack.c.l.b16 %v1563
        %v1568 = vpack.c.b16 %v1565, %v1564
        %v1569 = vpack.c.b16 %v1567, %v1566
        %v1571 = vsel %vm886, %v1568, 0
        %v1574 = vsel %vm886, %v1569, 0
        %v1577 = vsel %vm893, %v1507, 0
        %1579 = vmatprep.subr.bf16.mxu0 0
        %1580 = vmatpush1.bf16.msra.mxu0 %v1577
        %1581 = vmatprep.subr.bf16.mxu0 0
        %1582 = vmatpush1.bf16.msra.mxu0 0
        %1583 = vmatprep.subr.bf16.mxu0 0
        %1584 = vmatpush1.bf16.msra.mxu0 0
        %1585 = vmatprep.subr.bf16.mxu0 0
        %1586 = vmatpush1.bf16.msra.mxu0 0
        %1587 = vmatprep.subr.bf16.mxu0 0
        %1588 = vmatpush1.bf16.msra.mxu0 0
        %1589 = vmatprep.subr.bf16.mxu0 0
        %1590 = vmatpush1.bf16.msra.mxu0 0
        %1591 = vmatprep.subr.bf16.mxu0 0
        %1592 = vmatpush1.bf16.msra.mxu0 0
        %1593 = vmatprep.subr.bf16.mxu0 0
        %1594 = vmatpush1.bf16.msra.mxu0 0
        %1595 = vmatprep.subr.bf16.mxu0 0
        %1596 = vmatpush1.bf16.msra.mxu0 0
        %1597 = vmatprep.subr.bf16.mxu0 0
        %1598 = vmatpush1.bf16.msra.mxu0 0
        %1599 = vmatprep.subr.bf16.mxu0 0
        %1600 = vmatpush1.bf16.msra.mxu0 0
        %1601 = vmatprep.subr.bf16.mxu0 0
        %1602 = vmatpush1.bf16.msra.mxu0 0
        %1603 = vmatprep.subr.bf16.mxu0 0
        %1604 = vmatpush1.bf16.msra.mxu0 0
        %1605 = vmatprep.subr.bf16.mxu0 0
        %1606 = vmatpush1.bf16.msra.mxu0 0
        %1607 = vmatprep.subr.bf16.mxu0 0
        %1608 = vmatpush1.bf16.msra.mxu0 0
        %1609 = vmatprep.subr.bf16.mxu0 0
        %1610 = vmatpush1.bf16.msra.mxu0 0
        %1611 = vmatprep.mubr.bf16.mxu0 0
        %1612 = vmatmul.mubr.bf16.gmra.mrb[0].mxu0 %v1571
        %v1613 = vpop.f32.mrb[0].mxu0
        %v1614 = vadd.f32 0.0, %v1613
        %v1615 = vpop.f32.mrb[0].mxu0
        %v1616 = vpop.f32.mrb[0].mxu0
        %v1617 = vadd.f32 0.0, %v1616
        %v1618 = vpop.f32.mrb[0].mxu0
        %1619 = vmatprep.mubr.bf16.mxu0 0
        %1620 = vmatmul.mubr.bf16.gmra.mrb[0].mxu0 %v1574
        %v1621 = vpop.f32.mrb[0].mxu0
        %v1622 = vadd.f32 0.0, %v1621
        %v1623 = vpop.f32.mrb[0].mxu0
        %v1624 = vpop.f32.mrb[0].mxu0
        %v1625 = vadd.f32 0.0, %v1624
        %v1626 = vpop.f32.mrb[0].mxu0
        %1627 = vdwg.mxu0
        %v1628 = vadd.f32 %v1495, %v1614
        %v1629 = vadd.f32 %v1496, %v1617
        %v1630 = vadd.f32 %v1497, %v1622
        %v1631 = vadd.f32 %v1498, %v1625
        %v1632 = vld [vmem:[%s1421] sm:$0xe]
        %v1633 = vld [vmem:[%s1421 + $0x8] sm:$0xe]
        %v1634 = vld [vmem:[%s1421 + $0x10] sm:$0xe]
        %v1635 = vld [vmem:[%s1421 + $0x18] sm:$0xe]
        %v1636 = vld [vmem:[%s4 + $0x20] sm:$0xf]
        %v1645 = vrot.slane %v1632, 5
        %v1646 = vrot.slane %v1645, 4
        %v1647 = vrot.slane %v1500, 5
        %v1648 = vsel %vm1029, %v1646, %v1647
        %v1649 = vrot.slane %v1633, 5
        %v1650 = vrot.slane %v1649, 4
        %v1651 = vrot.slane %v1502, 5
        %v1652 = vsel %vm1029, %v1650, %v1651
        %v1653 = vrot.slane %v1634, 5
        %v1654 = vrot.slane %v1653, 4
        %v1655 = vrot.slane %v1504, 5
        %v1656 = vsel %vm1029, %v1654, %v1655
        %v1657 = vrot.slane %v1635, 5
        %v1658 = vrot.slane %v1657, 4
        %v1659 = vrot.slane %v1506, 5
        %v1660 = vsel %vm1029, %v1658, %v1659
        %v1661 = vunpack.c.l.b16 %v1648
        %v1662 = vunpack.c.l.b16 %v1652
        %v1663 = vunpack.c.l.b16 %v1656
        %v1664 = vunpack.c.l.b16 %v1660
        %v1665 = vpack.c.b16 %v1662, %v1661
        %v1666 = vpack.c.b16 %v1664, %v1663
        %v1668 = vsel %vm886, %v1665, 0
        %v1671 = vsel %vm886, %v1666, 0
        %v1674 = vsel %vm893, %v1636, 0
        %1676 = vmatprep.subr.bf16.mxu0 0
        %1677 = vmatpush1.bf16.msra.mxu0 %v1674
        %1678 = vmatprep.subr.bf16.mxu0 0
        %1679 = vmatpush1.bf16.msra.mxu0 0
        %1680 = vmatprep.subr.bf16.mxu0 0
        %1681 = vmatpush1.bf16.msra.mxu0 0
        %1682 = vmatprep.subr.bf16.mxu0 0
        %1683 = vmatpush1.bf16.msra.mxu0 0
        %1684 = vmatprep.subr.bf16.mxu0 0
        %1685 = vmatpush1.bf16.msra.mxu0 0
        %1686 = vmatprep.subr.bf16.mxu0 0
        %1687 = vmatpush1.bf16.msra.mxu0 0
        %1688 = vmatprep.subr.bf16.mxu0 0
        %1689 = vmatpush1.bf16.msra.mxu0 0
        %1690 = vmatprep.subr.bf16.mxu0 0
        %1691 = vmatpush1.bf16.msra.mxu0 0
        %1692 = vmatprep.subr.bf16.mxu0 0
        %1693 = vmatpush1.bf16.msra.mxu0 0
        %1694 = vmatprep.subr.bf16.mxu0 0
        %1695 = vmatpush1.bf16.msra.mxu0 0
        %1696 = vmatprep.subr.bf16.mxu0 0
        %1697 = vmatpush1.bf16.msra.mxu0 0
        %1698 = vmatprep.subr.bf16.mxu0 0
        %1699 = vmatpush1.bf16.msra.mxu0 0
        %1700 = vmatprep.subr.bf16.mxu0 0
        %1701 = vmatpush1.bf16.msra.mxu0 0
        %1702 = vmatprep.subr.bf16.mxu0 0
        %1703 = vmatpush1.bf16.msra.mxu0 0
        %1704 = vmatprep.subr.bf16.mxu0 0
        %1705 = vmatpush1.bf16.msra.mxu0 0
        %1706 = vmatprep.subr.bf16.mxu0 0
        %1707 = vmatpush1.bf16.msra.mxu0 0
        %1708 = vmatprep.mubr.bf16.mxu0 0
        %1709 = vmatmul.mubr.bf16.gmra.mrb[0].mxu0 %v1668
        %v1710 = vpop.f32.mrb[0].mxu0
        %v1711 = vadd.f32 0.0, %v1710
        %v1712 = vpop.f32.mrb[0].mxu0
        %v1713 = vpop.f32.mrb[0].mxu0
        %v1714 = vadd.f32 0.0, %v1713
        %v1715 = vpop.f32.mrb[0].mxu0
        %1716 = vmatprep.mubr.bf16.mxu0 0
        %1717 = vmatmul.mubr.bf16.gmra.mrb[0].mxu0 %v1671
        %v1718 = vpop.f32.mrb[0].mxu0
        %v1719 = vadd.f32 0.0, %v1718
        %v1720 = vpop.f32.mrb[0].mxu0
        %v1721 = vpop.f32.mrb[0].mxu0
        %v1722 = vadd.f32 0.0, %v1721
        %v1723 = vpop.f32.mrb[0].mxu0
        %1724 = vdwg.mxu0
        %v1725 = vadd.f32 %v1628, %v1711
        %v1726 = vadd.f32 %v1629, %v1714
        %v1727 = vadd.f32 %v1630, %v1719
        %v1728 = vadd.f32 %v1631, %v1722
        %v1729 = vld [vmem:[%s5] sm:$0x1]
        %v1731 = vlaneseq
        %v1732 = vshrl.u32 %v1731, 7
        %v1733 = vsub.s32 0, %v1732
        %v1734 = vrot.slane %v1729, %v1733
        %v1736 = vadd.f32 %v1725, %v1734
        %v1737 = vadd.f32 %v1726, %v1734
        %v1738 = vadd.f32 %v1727, %v1734
        %v1739 = vadd.f32 %v1728, %v1734
        %v1740 = vmax.f32 %v1736, 0.0
        %v1741 = vmax.f32 %v1737, 0.0
        %v1742 = vmax.f32 %v1738, 0.0
        %v1743 = vmax.f32 %v1739, 0.0
        %v1744 = vpack.c.bf16 %v1741, %v1740
        %v1745 = vpack.c.bf16 %v1743, %v1742
        %v1746 = vld [vmem:[%s6] sm:$0xf]
        %v1747 = vld [vmem:[%s7] sm:$0x1]
        %v1749 = vlaneseq
        %v1750 = vshrl.u32 %v1749, 7
        %v1751 = vsub.s32 0, %v1750
        %v1752 = vrot.slane %v1747, %v1751
        %v1755 = vsel %vm886, %v1744, 0
        %v1758 = vsel %vm886, %v1745, 0
        %v1761 = vsel %vm893, %v1746, 0
        %1763 = vmatprep.subr.bf16.mxu0 0
        %1764 = vmatpush1.bf16.msra.mxu0 %v1761
        %1765 = vmatprep.subr.bf16.mxu0 0
        %1766 = vmatpush1.bf16.msra.mxu0 0
        %1767 = vmatprep.subr.bf16.mxu0 0
        %1768 = vmatpush1.bf16.msra.mxu0 0
        %1769 = vmatprep.subr.bf16.mxu0 0
        %1770 = vmatpush1.bf16.msra.mxu0 0
        %1771 = vmatprep.subr.bf16.mxu0 0
        %1772 = vmatpush1.bf16.msra.mxu0 0
        %1773 = vmatprep.subr.bf16.mxu0 0
        %1774 = vmatpush1.bf16.msra.mxu0 0
        %1775 = vmatprep.subr.bf16.mxu0 0
        %1776 = vmatpush1.bf16.msra.mxu0 0
        %1777 = vmatprep.subr.bf16.mxu0 0
        %1778 = vmatpush1.bf16.msra.mxu0 0
        %1779 = vmatprep.subr.bf16.mxu0 0
        %1780 = vmatpush1.bf16.msra.mxu0 0
        %1781 = vmatprep.subr.bf16.mxu0 0
        %1782 = vmatpush1.bf16.msra.mxu0 0
        %1783 = vmatprep.subr.bf16.mxu0 0
        %1784 = vmatpush1.bf16.msra.mxu0 0
        %1785 = vmatprep.subr.bf16.mxu0 0
        %1786 = vmatpush1.bf16.msra.mxu0 0
        %1787 = vmatprep.subr.bf16.mxu0 0
        %1788 = vmatpush1.bf16.msra.mxu0 0
        %1789 = vmatprep.subr.bf16.mxu0 0
        %1790 = vmatpush1.bf16.msra.mxu0 0
        %1791 = vmatprep.subr.bf16.mxu0 0
        %1792 = vmatpush1.bf16.msra.mxu0 0
        %1793 = vmatprep.subr.bf16.mxu0 0
        %1794 = vmatpush1.bf16.msra.mxu0 0
        %1795 = vmatprep.mubr.bf16.mxu0 0
        %1796 = vmatmul.mubr.bf16.gmra.mrb[0].mxu0 %v1755
        %v1797 = vpop.f32.mrb[0].mxu0
        %v1798 = vadd.f32 %v1752, %v1797
        %v1799 = vpop.f32.mrb[0].mxu0
        %v1800 = vpop.f32.mrb[0].mxu0
        %v1801 = vadd.f32 %v1752, %v1800
        %v1802 = vpop.f32.mrb[0].mxu0
        %1803 = vmatprep.mubr.bf16.mxu0 0
        %1804 = vmatmul.mubr.bf16.gmra.mrb[0].mxu0 %v1758
        %v1805 = vpop.f32.mrb[0].mxu0
        %v1806 = vadd.f32 %v1752, %v1805
        %v1807 = vpop.f32.mrb[0].mxu0
        %v1808 = vpop.f32.mrb[0].mxu0
        %v1809 = vadd.f32 %v1752, %v1808
        %v1810 = vpop.f32.mrb[0].mxu0
        %1811 = vdwg.mxu0
        %v1812 = vld [vmem:[%s8] sm:$0xf]
        %v1813 = vld [vmem:[%s8 + $0x4] sm:$0xf]
        %v1814 = vld [vmem:[%s9] sm:$0x1]
        %v1816 = vlaneseq
        %v1817 = vshrl.u32 %v1816, 7
        %v1818 = vsub.s32 0, %v1817
        %v1819 = vrot.slane %v1814, %v1818
        %v1823 = vunpack.c.l.b16 %v1812
        %v1824 = vunpack.c.l.b16 %v1813
        %v1825 = vpack.c.b16 %v1824, %v1823
        %1827 = vmatprep.subr.bf16.mxu0 0
        %1828 = vmatpush1.bf16.msra.mxu0 %v1825
        %1829 = vmatprep.subr.bf16.mxu0 0
        %1830 = vmatpush1.bf16.msra.mxu0 0
        %1831 = vmatprep.subr.bf16.mxu0 0
        %1832 = vmatpush1.bf16.msra.mxu0 0
        %1833 = vmatprep.subr.bf16.mxu0 0
        %1834 = vmatpush1.bf16.msra.mxu0 0
        %1835 = vmatprep.subr.bf16.mxu0 0
        %1836 = vmatpush1.bf16.msra.mxu0 0
        %1837 = vmatprep.subr.bf16.mxu0 0
        %1838 = vmatpush1.bf16.msra.mxu0 0
        %1839 = vmatprep.subr.bf16.mxu0 0
        %1840 = vmatpush1.bf16.msra.mxu0 0
        %1841 = vmatprep.subr.bf16.mxu0 0
        %1842 = vmatpush1.bf16.msra.mxu0 0
        %1843 = vmatprep.subr.bf16.mxu0 0
        %1844 = vmatpush1.bf16.msra.mxu0 0
        %1845 = vmatprep.subr.bf16.mxu0 0
        %1846 = vmatpush1.bf16.msra.mxu0 0
        %1847 = vmatprep.subr.bf16.mxu0 0
        %1848 = vmatpush1.bf16.msra.mxu0 0
        %1849 = vmatprep.subr.bf16.mxu0 0
        %1850 = vmatpush1.bf16.msra.mxu0 0
        %1851 = vmatprep.subr.bf16.mxu0 0
        %1852 = vmatpush1.bf16.msra.mxu0 0
        %1853 = vmatprep.subr.bf16.mxu0 0
        %1854 = vmatpush1.bf16.msra.mxu0 0
        %1855 = vmatprep.subr.bf16.mxu0 0
        %1856 = vmatpush1.bf16.msra.mxu0 0
        %1857 = vmatprep.subr.bf16.mxu0 0
        %1858 = vmatpush1.bf16.msra.mxu0 0
        %1859 = vmatprep.mubr.bf16.mxu0 0
        %1860 = vmatmul.mubr.bf16.gmra.mrb[0].mxu0 %v467
        %v1861 = vpop.f32.mrb[0].mxu0
        %v1862 = vadd.f32 %v1819, %v1861
        %v1863 = vpop.f32.mrb[0].mxu0
        %v1864 = vpop.f32.mrb[0].mxu0
        %v1865 = vadd.f32 %v1819, %v1864
        %v1866 = vpop.f32.mrb[0].mxu0
        %1867 = vmatprep.mubr.bf16.mxu0 0
        %1868 = vmatmul.mubr.bf16.gmra.mrb[0].mxu0 %v470
        %v1869 = vpop.f32.mrb[0].mxu0
        %v1870 = vadd.f32 %v1819, %v1869
        %v1871 = vpop.f32.mrb[0].mxu0
        %v1872 = vpop.f32.mrb[0].mxu0
        %v1873 = vadd.f32 %v1819, %v1872
        %v1874 = vpop.f32.mrb[0].mxu0
        %1875 = vdwg.mxu0
        %v1876 = vadd.f32 %v1798, %v1862
        %v1877 = vadd.f32 %v1801, %v1865
        %v1878 = vadd.f32 %v1806, %v1870
        %v1879 = vadd.f32 %v1809, %v1873
        %v1880 = vmax.f32 %v1876, 0.0
        %v1881 = vmax.f32 %v1877, 0.0
        %v1882 = vmax.f32 %v1878, 0.0
        %v1883 = vmax.f32 %v1879, 0.0
        %vm1884 = vcmask 261120
        %1885 = vst.msk [vmem:[%s439] sm:$0xff] %vm1884, %v1880
        %1886 = vst.msk [vmem:[%s439 + $0x8] sm:$0xff] %vm1884, %v1881
        %1887 = vst.msk [vmem:[%s439 + $0x10] sm:$0xff] %vm1884, %v1882
        %1888 = vst.msk [vmem:[%s439 + $0x18] sm:$0xff] %vm1884, %v1883
        %s1889 = sand.u32 %s276, 1
        %s1890 = scalar_lea.sflag [#allocation5], %s1889
        %s1891 = sand.u32 %s276, 1
        %s1892 = smul.addr %s1891, 32
        %s1893 = scalar_lea.vmem [#allocation8], %s1892
        // Predicated region
        $region85: #{tpu_custom_call.1} parent=59 // pred_check
          %p1894 = pneg %p286
        $region86: #{tpu_custom_call.1} parent=59 // pred_check_branch
          %1896 = sbr.rel (%p1894) target = $region88
        $region87: #{tpu_custom_call.1} parent=59 // pred_region
          %s1897 = smul.u32 4, %s35
          %s1899 = ssub.s32 512, 512
          %1900 = vsyncadd %s1890, %s1899
          %s1901 = smul.addr %s34, 8
          %s1902 = sadd.s32 %s1897, %s1901
          %s1903 = smul.addr %s1902, 128
          %s1904 = scalar_lea.hbm %s10, %s1903
          %s1905 = sshll.u32 %s1893, 4
          %s1906 = int_to_ptr.vmem [resolvable:$true] %s1905
          %1911 = dma.vmem_to_hbm [thread:$0]  %s1906, 512, %s1904, %s1890, 128, 128, 8
        $region88: #{tpu_custom_call.1} parent=59 // pred_fallthru
          _
      $region60: #{tpu_custom_call.1} parent=5 // pred_fallthru
        _
      %p1912 = scmp.le.s32.totalorder 2, %s25
      // Predicated region
      $region89: #{tpu_custom_call.1} parent=5 // pred_check
        %p1913 = pneg %p1912
      $region90: #{tpu_custom_call.1} parent=5 // pred_check_branch
        %1915 = sbr.rel (%p1913) target = $region92
      $region91: #{tpu_custom_call.1} parent=5 // pred_region
        %s1916 = ssub.s32 %s25, 2
        // Predicated region
        $region93: #{tpu_custom_call.1} parent=91 // pred_check
          %p1917 = pneg %p292
        $region94: #{tpu_custom_call.1} parent=91 // pred_check_branch
          %1919 = sbr.rel (%p1917) target = $region96
        $region95: #{tpu_custom_call.1} parent=91 // pred_region
          %s1920 = sand.u32 %s277, 1
          %s1921 = scalar_lea.sflag [#allocation5], %s1920
          %s1922 = sand.u32 %s277, 1
          %s1923 = smul.addr %s1922, 32
          %s1924 = scalar_lea.vmem [#allocation8], %s1923
          %1925 = dma.done %s1921, 512
        $region96: #{tpu_custom_call.1} parent=91 // pred_fallthru
          _
      $region92: #{tpu_custom_call.1} parent=5 // pred_fallthru
        _
    $region6: #{tpu_custom_call.1} parent=1 // loop_footer
      %s29 = sadd.s32 1, %s25
    $region7: #{tpu_custom_call.1} parent=1 // loop_footer_branch
      %24 = sbr.rel target = $region3
    $region8: #{tpu_custom_call.1} parent=1 // loop_exit
      _
    %1926 = vsyncpa [#allocation4], 1
    %s1927 = scalar_lea.sflag [#allocation4], 1
    %1928 = vsyncpa %s1927, 1
    %1929 = vsyncpa [#allocation7], 1
    %s1930 = scalar_lea.sflag [#allocation7], 1
    %1931 = vsyncpa %s1930, 1
    %1932 = vsyncpa [#allocation5], 1
    %s1933 = scalar_lea.sflag [#allocation5], 1
    %1934 = vsyncpa %s1933, 1

</llo_original>
